<compile_context>
chip_gen: v5e
topology: v5e:2x2
jax: 0.10.0
libtpu: 0.0.40
codegen_flags: <defaults>
</compile_context>

<pallas_src>
import functools

import jax
import jax.numpy as jnp
import numpy as np
from jax import lax
from jax.experimental import pallas as pl
from jax.experimental.pallas import tpu as pltpu


def _round_up(x, m):
    return (x + m - 1) // m * m


def _pick_time_chunk(T, target=16):
    """Largest divisor of T that is <= target (static Python int)."""
    tc = min(T, target)
    while T % tc:
        tc -= 1
    return tc


def _pick_batch_block(Bp, align, target=256):
    """Batch-block size: whole padded batch if small, else <=target rows."""
    if Bp <= target:
        return Bp
    bb = (target // align) * align
    while Bp % bb:
        bb -= align
    return max(bb, align)


def _vmem_limit_bytes(need):
    """Scoped-VMEM limit from the actual padded buffer sizes (2x headroom),
    capped below physical VMEM (64 MiB/TC on v7x, 128 MiB on v5e/v6e)."""
    try:
        phys = getattr(pltpu.get_tpu_info(), "vmem_capacity_bytes", None) or (64 << 20)
    except Exception:
        phys = 64 << 20
    cap = int(phys * 0.85)
    return int(min(max(2 * need, 16 << 20), cap))


def _dkt_kernel(x_ref, wih_ref, whh_ref, b_ref, wdec_ref, bdec_ref,
                h0_ref, c0_ref,
                dec_ref, hT_ref, cT_ref,
                gx_scr):
    """One (batch-block, time-chunk) grid step:
       batched input projection -> LSTM recurrence -> lane-dense decode."""
    Bb, Hp = hT_ref.shape                 # batch-block rows / padded hidden (static)
    Tc = x_ref.shape[0] // Bb             # timesteps in this chunk (static)
    cdt = wih_ref.dtype                   # compute dtype (bf16 or f32)

    # (0) First time-chunk of each batch block: seed the carried state from h0/c0.
    #     hT_ref/cT_ref keep the same block index across the time axis, so they
    #     stay resident in VMEM and carry h/c from chunk to chunk.
    @pl.when(pl.program_id(1) == 0)
    def _():
        hT_ref[...] = h0_ref[...]
        cT_ref[...] = c0_ref[...]

    # (1) Input projection for the whole chunk in ONE MXU matmul (no sequential
    #     dependence):  gx[t*Bb + b, :] = x_t[b] @ W_ih^T + (b_ih + b_hh)
    gx_scr[...] = (jnp.dot(x_ref[...], wih_ref[...],
                           preferred_element_type=jnp.float32) + b_ref[...])

    # (2) LSTM recurrence inside the chunk; only h @ W_hh^T is on the serial
    #     critical path.  h/c carried as f32 values (small per batch block).
    def step(t, carry):
        h, c = carry
        off = pl.multiple_of(t * Bb, Bb)
        gates = (gx_scr[pl.ds(off, Bb), :]
                 + jnp.dot(h.astype(cdt), whh_ref[...],
                           preferred_element_type=jnp.float32))
        # PyTorch gate order i, f, g, o; each slice is lane-aligned (Hp % 128 == 0).
        i_g = jax.nn.sigmoid(gates[:, 0 * Hp:1 * Hp])
        f_g = jax.nn.sigmoid(gates[:, 1 * Hp:2 * Hp])
        g_g = jnp.tanh(gates[:, 2 * Hp:3 * Hp])
        o_g = jax.nn.sigmoid(gates[:, 3 * Hp:4 * Hp])
        c_new = f_g * c + i_g * g_g
        h_new = o_g * jnp.tanh(c_new)
        # Recycle the dead i-gate lanes of gx as per-step hidden-state storage
        # (saves a separate (Tc*Bb, Hp) scratch; lane slice is 128-aligned).
        gx_scr[pl.ds(off, Bb), 0:Hp] = h_new
        return (h_new, c_new)

    hT, cT = lax.fori_loop(0, Tc, step, (hT_ref[...], cT_ref[...]),
                           unroll=min(Tc, 8))
    hT_ref[...] = hT
    cT_ref[...] = cT

    # (3) Decoder off the recurrent path: one lane-dense matmul over the chunk's
    #     hidden states, stored as an unmasked (Tc*Bb, Sp) slab.
    h_all = gx_scr[:, 0:Hp].astype(cdt)
    dec_ref[...] = (jnp.dot(h_all, wdec_ref[...],
                            preferred_element_type=jnp.float32) + bdec_ref[...])


def prepare_params(params, compute_dtype=jnp.bfloat16):
    """Pad / transpose / cast the weights ONCE (outside the per-call path).
    Zero padding of hidden lanes keeps the real outputs exact: padded gates are
    sigmoid(0)/tanh(0) combined with zero c0, so padded h/c lanes stay 0."""
    H = params["w_hh"].shape[1]
    S = params["w_dec"].shape[0]
    Hp = _round_up(H, 128)     # lane multiple -> vreg-aligned gate slices
    Sp = _round_up(S, 128)     # lane-dense decoder output

    def pad_gate_rows(w):                                   # (4H, X) -> (4Hp, X)
        X = w.shape[1]
        return jnp.pad(w.reshape(4, H, X),
                       ((0, 0), (0, Hp - H), (0, 0))).reshape(4 * Hp, X)

    w_ih_t = pad_gate_rows(params["w_ih"]).T.astype(compute_dtype)          # (I, 4Hp)
    w_hh_t = jnp.pad(pad_gate_rows(params["w_hh"]),
                     ((0, 0), (0, Hp - H))).T.astype(compute_dtype)         # (Hp, 4Hp)
    bias = jnp.pad((params["b_ih"] + params["b_hh"]).reshape(4, H),
                   ((0, 0), (0, Hp - H))).reshape(1, 4 * Hp).astype(jnp.float32)
    w_dec_t = jnp.pad(params["w_dec"],
                      ((0, Sp - S), (0, Hp - H))).T.astype(compute_dtype)   # (Hp, Sp)
    b_dec = jnp.pad(params["b_dec"], (0, Sp - S)).reshape(1, Sp).astype(jnp.float32)
    return dict(w_ih_t=w_ih_t, w_hh_t=w_hh_t, bias=bias,
                w_dec_t=w_dec_t, b_dec=b_dec)


def dkt_forward(x_btI, h0, c0, prep, *, num_skills, time_chunk=None, batch_block=None):
    """x_btI: (B, T, I) batch_first input.  h0/c0: (1, B, H).  prep: prepare_params().
    Returns (decoded (B*T, S), (h_n, c_n))."""
    B, T, I = x_btI.shape
    H = h0.shape[2]
    S = num_skills
    Hp = prep["w_hh_t"].shape[0]
    Sp = prep["w_dec_t"].shape[1]
    cdt = prep["w_hh_t"].dtype
    itemsize = jnp.dtype(cdt).itemsize

    b_align = 16 if itemsize == 2 else 8          # sublane packing of x blocks
    Bp = _round_up(B, b_align)
    Tc = time_chunk if time_chunk is not None else _pick_time_chunk(T)
    assert T % Tc == 0, "time_chunk must divide T"
    Bb = batch_block if batch_block is not None else _pick_batch_block(Bp, b_align)
    assert Bp % Bb == 0, "batch_block must divide padded batch"
    nBb = Bp // Bb

    # ---- per-call activation layout (zero padding keeps real outputs exact) ----
    # x: (B,T,I) -> (nBb, T*Bb, I): per batch block, time-major rows so one grid
    # step's block is the contiguous slab of its Tc timesteps x Bb rows.
    x_p = jnp.pad(x_btI, ((0, Bp - B), (0, 0), (0, 0)))                 # (Bp, T, I)
    x_p = x_p.reshape(nBb, Bb, T, I).transpose(0, 2, 1, 3)              # (nBb, T, Bb, I)
    x_p = x_p.reshape(nBb, T * Bb, I).astype(cdt)
    h0p = jnp.pad(h0[0], ((0, Bp - B), (0, Hp - H)))                    # (Bp, Hp) f32
    c0p = jnp.pad(c0[0], ((0, Bp - B), (0, Hp - H)))

    grid = (nBb, T // Tc)   # (parallel batch blocks, sequential time chunks)

    def const_spec(shape):  # whole-array block, never re-fetched across the grid
        return pl.BlockSpec(shape, lambda b, t, _n=len(shape): (0,) * _n)

    f32b = 4
    vmem_need = (
        2 * Tc * Bb * I * itemsize                      # x blocks (double-buffered)
        + 2 * Tc * Bb * Sp * f32b                       # decoded blocks
        + 4 * 2 * Bb * Hp * f32b                        # h0/c0/h_n/c_n blocks
        + 2 * ((I + Hp) * 4 * Hp + Hp * Sp) * itemsize  # weights
        + 2 * (4 * Hp + Sp) * f32b                      # biases
        + Tc * Bb * 4 * Hp * f32b                       # gx scratch (recycled for h)
    )

    dec, hT, cT = pl.pallas_call(
        _dkt_kernel,
        out_shape=(
            jax.ShapeDtypeStruct((nBb, T * Bb, Sp), jnp.float32),
            jax.ShapeDtypeStruct((Bp, Hp), jnp.float32),
            jax.ShapeDtypeStruct((Bp, Hp), jnp.float32),
        ),
        grid_spec=pltpu.PrefetchScalarGridSpec(
            num_scalar_prefetch=0,
            grid=grid,
            in_specs=[
                pl.BlockSpec((None, Tc * Bb, I), lambda b, t: (b, t, 0)),   # x chunk
                const_spec(prep["w_ih_t"].shape),                           # W_ih^T
                const_spec(prep["w_hh_t"].shape),                           # W_hh^T
                const_spec(prep["bias"].shape),                             # b_ih+b_hh
                const_spec(prep["w_dec_t"].shape),                          # W_dec^T
                const_spec(prep["b_dec"].shape),                            # b_dec
                pl.BlockSpec((Bb, Hp), lambda b, t: (b, 0)),                # h0
                pl.BlockSpec((Bb, Hp), lambda b, t: (b, 0)),                # c0
            ],
            out_specs=(
                pl.BlockSpec((None, Tc * Bb, Sp), lambda b, t: (b, t, 0)),  # decoded
                pl.BlockSpec((Bb, Hp), lambda b, t: (b, 0)),                # h_n (carried)
                pl.BlockSpec((Bb, Hp), lambda b, t: (b, 0)),                # c_n (carried)
            ),
            scratch_shapes=[pltpu.VMEM((Tc * Bb, 4 * Hp), jnp.float32)],    # gx / h store
        ),
        compiler_params=pltpu.CompilerParams(
            dimension_semantics=("parallel", "arbitrary"),
            vmem_limit_bytes=_vmem_limit_bytes(vmem_need),
        ),
    )(x_p, prep["w_ih_t"], prep["w_hh_t"], prep["bias"],
      prep["w_dec_t"], prep["b_dec"], h0p, c0p)

    # (nBb, T*Bb, Sp) -> (B*T, S) in PyTorch's batch-first flatten order.
    dec = dec.reshape(nBb, T, Bb, Sp).transpose(0, 2, 1, 3).reshape(Bp, T, Sp)
    decoded = dec[:B, :, :S].reshape(B * T, S)
    hidden = (hT[:B, :H][None], cT[:B, :H][None])      # (nlayers=1, B, H)
    return decoded, hidden


def _reference_forward(x_btI, h0, c0, params):
    """Pure-JAX reference (LSTM scan + linear) mirroring PyTorch semantics."""
    H = params["w_hh"].shape[1]

    def step(carry, x_t):
        h, c = carry
        gates = (x_t @ params["w_ih"].T + h @ params["w_hh"].T
                 + params["b_ih"] + params["b_hh"])
        i = jax.nn.sigmoid(gates[:, 0 * H:1 * H])
        f = jax.nn.sigmoid(gates[:, 1 * H:2 * H])
        g = jnp.tanh(gates[:, 2 * H:3 * H])
        o = jax.nn.sigmoid(gates[:, 3 * H:4 * H])
        c_new = f * c + i * g
        h_new = o * jnp.tanh(c_new)
        return (h_new, c_new), h_new

    (hT, cT), out_tbh = lax.scan(step, (h0[0], c0[0]),
                                 jnp.transpose(x_btI, (1, 0, 2)))
    out_bth = jnp.transpose(out_tbh, (1, 0, 2))
    B, T, _ = out_bth.shape
    decoded = out_bth.reshape(B * T, H) @ params["w_dec"].T + params["b_dec"]
    return decoded, (hT[None], cT[None])


def init_params(key, input_size, hidden_size, num_skills):
    """Deterministic synthetic parameters matching nn.LSTM / nn.Linear shapes."""
    ks = jax.random.split(key, 5)
    k = 1.0 / np.sqrt(hidden_size)
    w_ih = jax.random.uniform(ks[0], (4 * hidden_size, input_size), jnp.float32, -k, k)
    w_hh = jax.random.uniform(ks[1], (4 * hidden_size, hidden_size), jnp.float32, -k, k)
    b_ih = jax.random.uniform(ks[2], (4 * hidden_size,), jnp.float32, -k, k)
    b_hh = jax.random.uniform(ks[3], (4 * hidden_size,), jnp.float32, -k, k)
    # init_weights(): decoder.weight ~ U(-0.05, 0.05), decoder.bias = 0
    w_dec = jax.random.uniform(ks[4], (num_skills, hidden_size), jnp.float32, -0.05, 0.05)
    b_dec = jnp.zeros((num_skills,), jnp.float32)
    return dict(w_ih=w_ih, w_hh=w_hh, b_ih=b_ih, b_hh=b_hh, w_dec=w_dec, b_dec=b_dec)


if __name__ == "__main__":
    # Small shapes: DKT-style input_size = 2 * num_skills.
    B, T = 2, 8
    num_skills = 16
    input_size = 2 * num_skills      # 32
    hidden_size = 32
    nlayers = 1

    key = jax.random.PRNGKey(0)
    k_param, k_x, k_h, k_c = jax.random.split(key, 4)
    params = init_params(k_param, input_size, hidden_size, num_skills)

    x = jax.random.normal(k_x, (B, T, input_size), jnp.float32)
    # Non-zero initial hidden state to exercise the hidden-state path
    # (init_hidden() in the module would give zeros; forward accepts either).
    h0 = 0.1 * jax.random.normal(k_h, (nlayers, B, hidden_size), jnp.float32)
    c0 = 0.1 * jax.random.normal(k_c, (nlayers, B, hidden_size), jnp.float32)

    ref_decoded, (ref_h, ref_c) = _reference_forward(x, h0, c0, params)

    # ---- f32 compute path: bit-accurate structural check (tight tolerance) ----
    prep_f32 = prepare_params(params, compute_dtype=jnp.float32)
    fwd_f32 = jax.jit(functools.partial(dkt_forward, num_skills=num_skills,
                                        time_chunk=4))      # 2 time chunks on the grid
    dec_f32, (h_f32, c_f32) = fwd_f32(x, h0, c0, prep_f32)
    jax.block_until_ready(dec_f32)
    np.testing.assert_allclose(np.asarray(dec_f32), np.asarray(ref_decoded),
                               rtol=1e-5, atol=1e-5)
    np.testing.assert_allclose(np.asarray(h_f32), np.asarray(ref_h), rtol=1e-5, atol=1e-5)
    np.testing.assert_allclose(np.asarray(c_f32), np.asarray(ref_c), rtol=1e-5, atol=1e-5)

    # ---- bf16 compute path (production default): looser numerical tolerance ----
    prep_bf16 = prepare_params(params, compute_dtype=jnp.bfloat16)
    fwd_bf16 = jax.jit(functools.partial(dkt_forward, num_skills=num_skills,
                                         time_chunk=4))
    dec_bf, (h_bf, c_bf) = fwd_bf16(x, h0, c0, prep_bf16)
    jax.block_until_ready(dec_bf)
    np.testing.assert_allclose(np.asarray(dec_bf), np.asarray(ref_decoded),
                               rtol=5e-2, atol=5e-2)
    np.testing.assert_allclose(np.asarray(h_bf), np.asarray(ref_h), rtol=5e-2, atol=5e-2)
    np.testing.assert_allclose(np.asarray(c_bf), np.asarray(ref_c), rtol=5e-2, atol=5e-2)

    print("KERNEL_OK")
</pallas_src>

<mosaic_0001>
module attributes {stable_mosaic.version = 11 : i64} {
  func.func @_dkt_kernel(%arg0: i32, %arg1: i32, %arg2: memref<1x32x32xf32, #tpu.memory_space<vmem>>, %arg3: memref<32x512xf32, #tpu.memory_space<vmem>>, %arg4: memref<128x512xf32, #tpu.memory_space<vmem>>, %arg5: memref<1x512xf32, #tpu.memory_space<vmem>>, %arg6: memref<128x128xf32, #tpu.memory_space<vmem>>, %arg7: memref<1x128xf32, #tpu.memory_space<vmem>>, %arg8: memref<8x128xf32, #tpu.memory_space<vmem>>, %arg9: memref<8x128xf32, #tpu.memory_space<vmem>>, %arg10: memref<1x32x128xf32, #tpu.memory_space<vmem>>, %arg11: memref<8x128xf32, #tpu.memory_space<vmem>>, %arg12: memref<8x128xf32, #tpu.memory_space<vmem>>, %arg13: memref<32x512xf32, #tpu.memory_space<vmem>>) attributes {dimension_semantics = [#tpu.dimension_semantics<parallel>, #tpu.dimension_semantics<arbitrary>], iteration_bounds = array<i64: 1, 2>, scalar_prefetch = 0 : i64, scratch_operands = 1 : i64, tpu.core_type = #tpu.core_type<tc>, window_params = [{transform_indices = @transform_0, window_bounds = array<i64: 1, 32, 32>}, {pipeline_mode = #tpu.pipeline_mode<synchronous>, transform_indices = @transform_1, window_bounds = array<i64: 32, 512>}, {pipeline_mode = #tpu.pipeline_mode<synchronous>, transform_indices = @transform_2, window_bounds = array<i64: 128, 512>}, {pipeline_mode = #tpu.pipeline_mode<synchronous>, transform_indices = @transform_3, window_bounds = array<i64: 1, 512>}, {pipeline_mode = #tpu.pipeline_mode<synchronous>, transform_indices = @transform_4, window_bounds = array<i64: 128, 128>}, {pipeline_mode = #tpu.pipeline_mode<synchronous>, transform_indices = @transform_5, window_bounds = array<i64: 1, 128>}, {transform_indices = @transform_6, window_bounds = array<i64: 8, 128>}, {transform_indices = @transform_7, window_bounds = array<i64: 8, 128>}, {transform_indices = @transform_8, window_bounds = array<i64: 1, 32, 128>}, {transform_indices = @transform_9, window_bounds = array<i64: 8, 128>}, {transform_indices = @transform_10, window_bounds = array<i64: 8, 128>}]} {
    %c0_i32 = arith.constant 0 : i32
    %0 = arith.cmpi eq, %arg1, %c0_i32 : i32
    %1 = arith.extui %0 : i1 to i32
    %c0_i32_0 = arith.constant 0 : i32
    %2 = arith.cmpi ne, %1, %c0_i32_0 : i32
    scf.if %2 {
      %c0_63 = arith.constant 0 : index
      %c0_64 = arith.constant 0 : index
      %160 = vector.load %arg8[%c0_63, %c0_64] : memref<8x128xf32, #tpu.memory_space<vmem>>, vector<8x128xf32>
      %c0_65 = arith.constant 0 : index
      %c0_66 = arith.constant 0 : index
      %161 = vector.load %arg11[%c0_65, %c0_66] : memref<8x128xf32, #tpu.memory_space<vmem>>, vector<8x128xf32>
      tpu.vector_store %arg11[%c0_65, %c0_66], %160 {strides = array<i32>} : memref<8x128xf32, #tpu.memory_space<vmem>>, vector<8x128xf32>,
      %c0_67 = arith.constant 0 : index
      %c0_68 = arith.constant 0 : index
      %162 = vector.load %arg9[%c0_67, %c0_68] : memref<8x128xf32, #tpu.memory_space<vmem>>, vector<8x128xf32>
      %c0_69 = arith.constant 0 : index
      %c0_70 = arith.constant 0 : index
      %163 = vector.load %arg12[%c0_69, %c0_70] : memref<8x128xf32, #tpu.memory_space<vmem>>, vector<8x128xf32>
      tpu.vector_store %arg12[%c0_69, %c0_70], %162 {strides = array<i32>} : memref<8x128xf32, #tpu.memory_space<vmem>>, vector<8x128xf32>,
    } else {
    }
    %c0 = arith.constant 0 : index
    %c0_1 = arith.constant 0 : index
    %c0_2 = arith.constant 0 : index
    %3 = vector.load %arg2[%c0, %c0_1, %c0_2] : memref<1x32x32xf32, #tpu.memory_space<vmem>>, vector<1x32x32xf32>
    %4 = vector.shape_cast %3 : vector<1x32x32xf32> to vector<32x32xf32>
    %c0_3 = arith.constant 0 : index
    %c0_4 = arith.constant 0 : index
    %5 = vector.load %arg3[%c0_3, %c0_4] : memref<32x512xf32, #tpu.memory_space<vmem>>, vector<32x512xf32>
    %cst = arith.constant dense<0.000000e+00> : vector<32x512xf32>
    %6 = tpu.matmul %4, %5, %cst {dimension_numbers = #tpu.dot_dimension_numbers<[1], [0], [0], [1], [0, 0, 1, 1], [], []>} : vector<32x32xf32>, vector<32x512xf32>, vector<32x512xf32> -> vector<32x512xf32>
    %c0_5 = arith.constant 0 : index
    %c0_6 = arith.constant 0 : index
    %7 = vector.load %arg5[%c0_5, %c0_6] : memref<1x512xf32, #tpu.memory_space<vmem>>, vector<1x512xf32>
    %8 = vector.broadcast %7 : vector<1x512xf32> to vector<32x512xf32>
    %9 = arith.addf %6, %8 : vector<32x512xf32>
    %c0_7 = arith.constant 0 : index
    %c0_8 = arith.constant 0 : index
    %10 = vector.load %arg13[%c0_7, %c0_8] : memref<32x512xf32, #tpu.memory_space<vmem>>, vector<32x512xf32>
    tpu.vector_store %arg13[%c0_7, %c0_8], %9 {strides = array<i32>} : memref<32x512xf32, #tpu.memory_space<vmem>>, vector<32x512xf32>,
    %c0_9 = arith.constant 0 : index
    %c0_10 = arith.constant 0 : index
    %11 = vector.load %arg11[%c0_9, %c0_10] : memref<8x128xf32, #tpu.memory_space<vmem>>, vector<8x128xf32>
    %c0_11 = arith.constant 0 : index
    %c0_12 = arith.constant 0 : index
    %12 = vector.load %arg12[%c0_11, %c0_12] : memref<8x128xf32, #tpu.memory_space<vmem>>, vector<8x128xf32>
    %c0_i32_13 = arith.constant 0 : i32
    %c8_i32 = arith.constant 8 : i32
    %13 = arith.muli %c0_i32_13, %c8_i32 : i32
    %14 = tpu.assume_multiple %13, 8 : i32
    %15 = arith.index_cast %14 : i32 to index
    %c0_14 = arith.constant 0 : index
    %16 = vector.load %arg13[%15, %c0_14] : memref<32x512xf32, #tpu.memory_space<vmem>>, vector<8x512xf32>
    %c0_15 = arith.constant 0 : index
    %c0_16 = arith.constant 0 : index
    %17 = vector.load %arg4[%c0_15, %c0_16] : memref<128x512xf32, #tpu.memory_space<vmem>>, vector<128x512xf32>
    %cst_17 = arith.constant dense<0.000000e+00> : vector<8x512xf32>
    %18 = tpu.matmul %11, %17, %cst_17 {dimension_numbers = #tpu.dot_dimension_numbers<[1], [0], [0], [1], [0, 0, 1, 1], [], []>} : vector<8x128xf32>, vector<128x512xf32>, vector<8x512xf32> -> vector<8x512xf32>
    %19 = arith.addf %16, %18 : vector<8x512xf32>
    %20 = vector.extract_strided_slice %19 {offsets = [0, 0], sizes = [8, 128], strides = [1, 1]} : vector<8x512xf32> to vector<8x128xf32>
    %21 = arith.negf %20 : vector<8x128xf32>
    %22 = math.exp %21 : vector<8x128xf32>
    %cst_18 = arith.constant 1.000000e+00 : f32
    %23 = vector.broadcast %cst_18 : f32 to vector<8x128xf32>
    %24 = arith.addf %23, %22 : vector<8x128xf32>
    %25 = arith.divf %23, %24 : vector<8x128xf32>
    %26 = vector.extract_strided_slice %19 {offsets = [0, 128], sizes = [8, 128], strides = [1, 1]} : vector<8x512xf32> to vector<8x128xf32>
    %27 = arith.negf %26 : vector<8x128xf32>
    %28 = math.exp %27 : vector<8x128xf32>
    %cst_19 = arith.constant 1.000000e+00 : f32
    %29 = vector.broadcast %cst_19 : f32 to vector<8x128xf32>
    %30 = arith.addf %29, %28 : vector<8x128xf32>
    %31 = arith.divf %29, %30 : vector<8x128xf32>
    %32 = vector.extract_strided_slice %19 {offsets = [0, 256], sizes = [8, 128], strides = [1, 1]} : vector<8x512xf32> to vector<8x128xf32>
    %33 = math.tanh %32 : vector<8x128xf32>
    %34 = vector.extract_strided_slice %19 {offsets = [0, 384], sizes = [8, 128], strides = [1, 1]} : vector<8x512xf32> to vector<8x128xf32>
    %35 = arith.negf %34 : vector<8x128xf32>
    %36 = math.exp %35 : vector<8x128xf32>
    %cst_20 = arith.constant 1.000000e+00 : f32
    %37 = vector.broadcast %cst_20 : f32 to vector<8x128xf32>
    %38 = arith.addf %37, %36 : vector<8x128xf32>
    %39 = arith.divf %37, %38 : vector<8x128xf32>
    %40 = arith.mulf %31, %12 : vector<8x128xf32>
    %41 = arith.mulf %25, %33 : vector<8x128xf32>
    %42 = arith.addf %40, %41 : vector<8x128xf32>
    %43 = math.tanh %42 : vector<8x128xf32>
    %44 = arith.mulf %39, %43 : vector<8x128xf32>
    %45 = arith.index_cast %14 : i32 to index
    %c0_21 = arith.constant 0 : index
    %46 = vector.load %arg13[%45, %c0_21] : memref<32x512xf32, #tpu.memory_space<vmem>>, vector<8x128xf32>
    tpu.vector_store %arg13[%45, %c0_21], %44 {strides = array<i32>} : memref<32x512xf32, #tpu.memory_space<vmem>>, vector<8x128xf32>,
    %c1_i32 = arith.constant 1 : i32
    %c8_i32_22 = arith.constant 8 : i32
    %47 = arith.muli %c1_i32, %c8_i32_22 : i32
    %48 = tpu.assume_multiple %47, 8 : i32
    %49 = arith.index_cast %48 : i32 to index
    %c0_23 = arith.constant 0 : index
    %50 = vector.load %arg13[%49, %c0_23] : memref<32x512xf32, #tpu.memory_space<vmem>>, vector<8x512xf32>
    %c0_24 = arith.constant 0 : index
    %c0_25 = arith.constant 0 : index
    %51 = vector.load %arg4[%c0_24, %c0_25] : memref<128x512xf32, #tpu.memory_space<vmem>>, vector<128x512xf32>
    %cst_26 = arith.constant dense<0.000000e+00> : vector<8x512xf32>
    %52 = tpu.matmul %44, %51, %cst_26 {dimension_numbers = #tpu.dot_dimension_numbers<[1], [0], [0], [1], [0, 0, 1, 1], [], []>} : vector<8x128xf32>, vector<128x512xf32>, vector<8x512xf32> -> vector<8x512xf32>
    %53 = arith.addf %50, %52 : vector<8x512xf32>
    %54 = vector.extract_strided_slice %53 {offsets = [0, 0], sizes = [8, 128], strides = [1, 1]} : vector<8x512xf32> to vector<8x128xf32>
    %55 = arith.negf %54 : vector<8x128xf32>
    %56 = math.exp %55 : vector<8x128xf32>
    %cst_27 = arith.constant 1.000000e+00 : f32
    %57 = vector.broadcast %cst_27 : f32 to vector<8x128xf32>
    %58 = arith.addf %57, %56 : vector<8x128xf32>
    %59 = arith.divf %57, %58 : vector<8x128xf32>
    %60 = vector.extract_strided_slice %53 {offsets = [0, 128], sizes = [8, 128], strides = [1, 1]} : vector<8x512xf32> to vector<8x128xf32>
    %61 = arith.negf %60 : vector<8x128xf32>
    %62 = math.exp %61 : vector<8x128xf32>
    %cst_28 = arith.constant 1.000000e+00 : f32
    %63 = vector.broadcast %cst_28 : f32 to vector<8x128xf32>
    %64 = arith.addf %63, %62 : vector<8x128xf32>
    %65 = arith.divf %63, %64 : vector<8x128xf32>
    %66 = vector.extract_strided_slice %53 {offsets = [0, 256], sizes = [8, 128], strides = [1, 1]} : vector<8x512xf32> to vector<8x128xf32>
    %67 = math.tanh %66 : vector<8x128xf32>
    %68 = vector.extract_strided_slice %53 {offsets = [0, 384], sizes = [8, 128], strides = [1, 1]} : vector<8x512xf32> to vector<8x128xf32>
    %69 = arith.negf %68 : vector<8x128xf32>
    %70 = math.exp %69 : vector<8x128xf32>
    %cst_29 = arith.constant 1.000000e+00 : f32
    %71 = vector.broadcast %cst_29 : f32 to vector<8x128xf32>
    %72 = arith.addf %71, %70 : vector<8x128xf32>
    %73 = arith.divf %71, %72 : vector<8x128xf32>
    %74 = arith.mulf %65, %42 : vector<8x128xf32>
    %75 = arith.mulf %59, %67 : vector<8x128xf32>
    %76 = arith.addf %74, %75 : vector<8x128xf32>
    %77 = math.tanh %76 : vector<8x128xf32>
    %78 = arith.mulf %73, %77 : vector<8x128xf32>
    %79 = arith.index_cast %48 : i32 to index
    %c0_30 = arith.constant 0 : index
    %80 = vector.load %arg13[%79, %c0_30] : memref<32x512xf32, #tpu.memory_space<vmem>>, vector<8x128xf32>
    tpu.vector_store %arg13[%79, %c0_30], %78 {strides = array<i32>} : memref<32x512xf32, #tpu.memory_space<vmem>>, vector<8x128xf32>,
    %c2_i32 = arith.constant 2 : i32
    %c8_i32_31 = arith.constant 8 : i32
    %81 = arith.muli %c2_i32, %c8_i32_31 : i32
    %82 = tpu.assume_multiple %81, 8 : i32
    %83 = arith.index_cast %82 : i32 to index
    %c0_32 = arith.constant 0 : index
    %84 = vector.load %arg13[%83, %c0_32] : memref<32x512xf32, #tpu.memory_space<vmem>>, vector<8x512xf32>
    %c0_33 = arith.constant 0 : index
    %c0_34 = arith.constant 0 : index
    %85 = vector.load %arg4[%c0_33, %c0_34] : memref<128x512xf32, #tpu.memory_space<vmem>>, vector<128x512xf32>
    %cst_35 = arith.constant dense<0.000000e+00> : vector<8x512xf32>
    %86 = tpu.matmul %78, %85, %cst_35 {dimension_numbers = #tpu.dot_dimension_numbers<[1], [0], [0], [1], [0, 0, 1, 1], [], []>} : vector<8x128xf32>, vector<128x512xf32>, vector<8x512xf32> -> vector<8x512xf32>
    %87 = arith.addf %84, %86 : vector<8x512xf32>
    %88 = vector.extract_strided_slice %87 {offsets = [0, 0], sizes = [8, 128], strides = [1, 1]} : vector<8x512xf32> to vector<8x128xf32>
    %89 = arith.negf %88 : vector<8x128xf32>
    %90 = math.exp %89 : vector<8x128xf32>
    %cst_36 = arith.constant 1.000000e+00 : f32
    %91 = vector.broadcast %cst_36 : f32 to vector<8x128xf32>
    %92 = arith.addf %91, %90 : vector<8x128xf32>
    %93 = arith.divf %91, %92 : vector<8x128xf32>
    %94 = vector.extract_strided_slice %87 {offsets = [0, 128], sizes = [8, 128], strides = [1, 1]} : vector<8x512xf32> to vector<8x128xf32>
    %95 = arith.negf %94 : vector<8x128xf32>
    %96 = math.exp %95 : vector<8x128xf32>
    %cst_37 = arith.constant 1.000000e+00 : f32
    %97 = vector.broadcast %cst_37 : f32 to vector<8x128xf32>
    %98 = arith.addf %97, %96 : vector<8x128xf32>
    %99 = arith.divf %97, %98 : vector<8x128xf32>
    %100 = vector.extract_strided_slice %87 {offsets = [0, 256], sizes = [8, 128], strides = [1, 1]} : vector<8x512xf32> to vector<8x128xf32>
    %101 = math.tanh %100 : vector<8x128xf32>
    %102 = vector.extract_strided_slice %87 {offsets = [0, 384], sizes = [8, 128], strides = [1, 1]} : vector<8x512xf32> to vector<8x128xf32>
    %103 = arith.negf %102 : vector<8x128xf32>
    %104 = math.exp %103 : vector<8x128xf32>
    %cst_38 = arith.constant 1.000000e+00 : f32
    %105 = vector.broadcast %cst_38 : f32 to vector<8x128xf32>
    %106 = arith.addf %105, %104 : vector<8x128xf32>
    %107 = arith.divf %105, %106 : vector<8x128xf32>
    %108 = arith.mulf %99, %76 : vector<8x128xf32>
    %109 = arith.mulf %93, %101 : vector<8x128xf32>
    %110 = arith.addf %108, %109 : vector<8x128xf32>
    %111 = math.tanh %110 : vector<8x128xf32>
    %112 = arith.mulf %107, %111 : vector<8x128xf32>
    %113 = arith.index_cast %82 : i32 to index
    %c0_39 = arith.constant 0 : index
    %114 = vector.load %arg13[%113, %c0_39] : memref<32x512xf32, #tpu.memory_space<vmem>>, vector<8x128xf32>
    tpu.vector_store %arg13[%113, %c0_39], %112 {strides = array<i32>} : memref<32x512xf32, #tpu.memory_space<vmem>>, vector<8x128xf32>,
    %c3_i32 = arith.constant 3 : i32
    %c8_i32_40 = arith.constant 8 : i32
    %115 = arith.muli %c3_i32, %c8_i32_40 : i32
    %116 = tpu.assume_multiple %115, 8 : i32
    %117 = arith.index_cast %116 : i32 to index
    %c0_41 = arith.constant 0 : index
    %118 = vector.load %arg13[%117, %c0_41] : memref<32x512xf32, #tpu.memory_space<vmem>>, vector<8x512xf32>
    %c0_42 = arith.constant 0 : index
    %c0_43 = arith.constant 0 : index
    %119 = vector.load %arg4[%c0_42, %c0_43] : memref<128x512xf32, #tpu.memory_space<vmem>>, vector<128x512xf32>
    %cst_44 = arith.constant dense<0.000000e+00> : vector<8x512xf32>
    %120 = tpu.matmul %112, %119, %cst_44 {dimension_numbers = #tpu.dot_dimension_numbers<[1], [0], [0], [1], [0, 0, 1, 1], [], []>} : vector<8x128xf32>, vector<128x512xf32>, vector<8x512xf32> -> vector<8x512xf32>
    %121 = arith.addf %118, %120 : vector<8x512xf32>
    %122 = vector.extract_strided_slice %121 {offsets = [0, 0], sizes = [8, 128], strides = [1, 1]} : vector<8x512xf32> to vector<8x128xf32>
    %123 = arith.negf %122 : vector<8x128xf32>
    %124 = math.exp %123 : vector<8x128xf32>
    %cst_45 = arith.constant 1.000000e+00 : f32
    %125 = vector.broadcast %cst_45 : f32 to vector<8x128xf32>
    %126 = arith.addf %125, %124 : vector<8x128xf32>
    %127 = arith.divf %125, %126 : vector<8x128xf32>
    %128 = vector.extract_strided_slice %121 {offsets = [0, 128], sizes = [8, 128], strides = [1, 1]} : vector<8x512xf32> to vector<8x128xf32>
    %129 = arith.negf %128 : vector<8x128xf32>
    %130 = math.exp %129 : vector<8x128xf32>
    %cst_46 = arith.constant 1.000000e+00 : f32
    %131 = vector.broadcast %cst_46 : f32 to vector<8x128xf32>
    %132 = arith.addf %131, %130 : vector<8x128xf32>
    %133 = arith.divf %131, %132 : vector<8x128xf32>
    %134 = vector.extract_strided_slice %121 {offsets = [0, 256], sizes = [8, 128], strides = [1, 1]} : vector<8x512xf32> to vector<8x128xf32>
    %135 = math.tanh %134 : vector<8x128xf32>
    %136 = vector.extract_strided_slice %121 {offsets = [0, 384], sizes = [8, 128], strides = [1, 1]} : vector<8x512xf32> to vector<8x128xf32>
    %137 = arith.negf %136 : vector<8x128xf32>
    %138 = math.exp %137 : vector<8x128xf32>
    %cst_47 = arith.constant 1.000000e+00 : f32
    %139 = vector.broadcast %cst_47 : f32 to vector<8x128xf32>
    %140 = arith.addf %139, %138 : vector<8x128xf32>
    %141 = arith.divf %139, %140 : vector<8x128xf32>
    %142 = arith.mulf %133, %110 : vector<8x128xf32>
    %143 = arith.mulf %127, %135 : vector<8x128xf32>
    %144 = arith.addf %142, %143 : vector<8x128xf32>
    %145 = math.tanh %144 : vector<8x128xf32>
    %146 = arith.mulf %141, %145 : vector<8x128xf32>
    %147 = arith.index_cast %116 : i32 to index
    %c0_48 = arith.constant 0 : index
    %148 = vector.load %arg13[%147, %c0_48] : memref<32x512xf32, #tpu.memory_space<vmem>>, vector<8x128xf32>
    tpu.vector_store %arg13[%147, %c0_48], %146 {strides = array<i32>} : memref<32x512xf32, #tpu.memory_space<vmem>>, vector<8x128xf32>,
    %c4_i32 = arith.constant 4 : i32
    %c0_49 = arith.constant 0 : index
    %c0_50 = arith.constant 0 : index
    %149 = vector.load %arg11[%c0_49, %c0_50] : memref<8x128xf32, #tpu.memory_space<vmem>>, vector<8x128xf32>
    tpu.vector_store %arg11[%c0_49, %c0_50], %146 {strides = array<i32>} : memref<8x128xf32, #tpu.memory_space<vmem>>, vector<8x128xf32>,
    %c0_51 = arith.constant 0 : index
    %c0_52 = arith.constant 0 : index
    %150 = vector.load %arg12[%c0_51, %c0_52] : memref<8x128xf32, #tpu.memory_space<vmem>>, vector<8x128xf32>
    tpu.vector_store %arg12[%c0_51, %c0_52], %144 {strides = array<i32>} : memref<8x128xf32, #tpu.memory_space<vmem>>, vector<8x128xf32>,
    %c0_53 = arith.constant 0 : index
    %c0_54 = arith.constant 0 : index
    %151 = vector.load %arg13[%c0_53, %c0_54] : memref<32x512xf32, #tpu.memory_space<vmem>>, vector<32x128xf32>
    %c0_55 = arith.constant 0 : index
    %c0_56 = arith.constant 0 : index
    %152 = vector.load %arg6[%c0_55, %c0_56] : memref<128x128xf32, #tpu.memory_space<vmem>>, vector<128x128xf32>
    %cst_57 = arith.constant dense<0.000000e+00> : vector<32x128xf32>
    %153 = tpu.matmul %151, %152, %cst_57 {dimension_numbers = #tpu.dot_dimension_numbers<[1], [0], [0], [1], [0, 0, 1, 1], [], []>} : vector<32x128xf32>, vector<128x128xf32>, vector<32x128xf32> -> vector<32x128xf32>
    %c0_58 = arith.constant 0 : index
    %c0_59 = arith.constant 0 : index
    %154 = vector.load %arg7[%c0_58, %c0_59] : memref<1x128xf32, #tpu.memory_space<vmem>>, vector<1x128xf32>
    %155 = vector.broadcast %154 : vector<1x128xf32> to vector<32x128xf32>
    %156 = arith.addf %153, %155 : vector<32x128xf32>
    %c0_60 = arith.constant 0 : index
    %c0_61 = arith.constant 0 : index
    %c0_62 = arith.constant 0 : index
    %157 = vector.load %arg10[%c0_60, %c0_61, %c0_62] : memref<1x32x128xf32, #tpu.memory_space<vmem>>, vector<1x32x128xf32>
    %158 = vector.shape_cast %157 : vector<1x32x128xf32> to vector<32x128xf32>
    %159 = vector.shape_cast %156 : vector<32x128xf32> to vector<1x32x128xf32>
    tpu.vector_store %arg10[%c0_60, %c0_61, %c0_62], %159 {strides = array<i32>} : memref<1x32x128xf32, #tpu.memory_space<vmem>>, vector<1x32x128xf32>,
    return
  }
  func.func @transform_0(%arg0: i32, %arg1: i32) -> (i32, i32, i32) {
    %c0_i32 = arith.constant 0 : i32
    %c0_i32_0 = arith.constant 0 : i32
    return %arg0, %arg1, %c0_i32 : i32, i32, i32
  }
  func.func @transform_1(%arg0: i32, %arg1: i32) -> (i32, i32) {
    %c0_i32 = arith.constant 0 : i32
    %c0_i32_0 = arith.constant 0 : i32
    %c0_i32_1 = arith.constant 0 : i32
    return %c0_i32, %c0_i32_0 : i32, i32
  }
  func.func @transform_2(%arg0: i32, %arg1: i32) -> (i32, i32) {
    %c0_i32 = arith.constant 0 : i32
    %c0_i32_0 = arith.constant 0 : i32
    %c0_i32_1 = arith.constant 0 : i32
    return %c0_i32, %c0_i32_0 : i32, i32
  }
  func.func @transform_3(%arg0: i32, %arg1: i32) -> (i32, i32) {
    %c0_i32 = arith.constant 0 : i32
    %c0_i32_0 = arith.constant 0 : i32
    %c0_i32_1 = arith.constant 0 : i32
    return %c0_i32, %c0_i32_0 : i32, i32
  }
  func.func @transform_4(%arg0: i32, %arg1: i32) -> (i32, i32) {
    %c0_i32 = arith.constant 0 : i32
    %c0_i32_0 = arith.constant 0 : i32
    %c0_i32_1 = arith.constant 0 : i32
    return %c0_i32, %c0_i32_0 : i32, i32
  }
  func.func @transform_5(%arg0: i32, %arg1: i32) -> (i32, i32) {
    %c0_i32 = arith.constant 0 : i32
    %c0_i32_0 = arith.constant 0 : i32
    %c0_i32_1 = arith.constant 0 : i32
    return %c0_i32, %c0_i32_0 : i32, i32
  }
  func.func @transform_6(%arg0: i32, %arg1: i32) -> (i32, i32) {
    %c0_i32 = arith.constant 0 : i32
    %c0_i32_0 = arith.constant 0 : i32
    return %arg0, %c0_i32 : i32, i32
  }
  func.func @transform_7(%arg0: i32, %arg1: i32) -> (i32, i32) {
    %c0_i32 = arith.constant 0 : i32
    %c0_i32_0 = arith.constant 0 : i32
    return %arg0, %c0_i32 : i32, i32
  }
  func.func @transform_8(%arg0: i32, %arg1: i32) -> (i32, i32, i32) {
    %c0_i32 = arith.constant 0 : i32
    %c0_i32_0 = arith.constant 0 : i32
    return %arg0, %arg1, %c0_i32 : i32, i32, i32
  }
  func.func @transform_9(%arg0: i32, %arg1: i32) -> (i32, i32) {
    %c0_i32 = arith.constant 0 : i32
    %c0_i32_0 = arith.constant 0 : i32
    return %arg0, %c0_i32 : i32, i32
  }
  func.func @transform_10(%arg0: i32, %arg1: i32) -> (i32, i32) {
    %c0_i32 = arith.constant 0 : i32
    %c0_i32_0 = arith.constant 0 : i32
    return %arg0, %c0_i32 : i32, i32
  }
}

</mosaic_0001>

<llo_original>
// kernel: dkt_forward.1
$region0: #{dkt_forward.1}
  #allocation0 [shape = 'u32[]', space=smem, size = 0x4, offset = 0x4, fixed_abs, tag = 'smem constant byte address 0x4 - core index']
  #allocation1 [shape = 'u32[72,128]{1,0:T(1,128)}', space=vmem, size = 0x9000, scoped, tag = 'internal scratch']
  #allocation2 [shape = 'f32[32,512]{1,0:T(8,128)}', space=vmem, size = 0x10000, scoped, tag = 'scratch operand']
  %s0 = inlined_call_operand.vmem [shape: f32[1,64,32], index: 0, kind: input, shape index: {}]
  %s1 = inlined_call_operand.vmem [shape: f32[32,512], index: 1, kind: input, shape index: {}]
  %s2 = inlined_call_operand.hbm [shape: f32[128,512], index: 2, kind: input, shape index: {}]
  %s3 = inlined_call_operand.vmem [shape: f32[1,512], index: 3, kind: input, shape index: {}]
  %s4 = inlined_call_operand.hbm [shape: f32[128,128], index: 4, kind: input, shape index: {}]
  %s5 = inlined_call_operand.vmem [shape: f32[1,128], index: 5, kind: input, shape index: {}]
  %s6 = inlined_call_operand.vmem [shape: f32[8,128], index: 6, kind: input, shape index: {}]
  %s7 = inlined_call_operand.vmem [shape: f32[8,128], index: 7, kind: input, shape index: {}]
  %s8 = inlined_call_operand.vmem [shape: f32[1,64,128], index: 8, kind: output, shape index: {0}]
  %s9 = inlined_call_operand.vmem [shape: f32[8,128], index: 9, kind: output, shape index: {1}]
  %s10 = inlined_call_operand.vmem [shape: f32[8,128], index: 10, kind: output, shape index: {2}]
  %11 = xla_tuple %s8, %s9, %s10
  %s12 = sld [smem:[#allocation0]]
  $region93: #{dkt_forward.1} parent=0
    _
  %s14 = ssub.s32 1, %s12
  %s15 = scalar_select 0, %s14, %s12
  $region1: #{dkt_forward.1} parent=0
    #allocation3 [shape = 'u8[262144]{0}', space=vmem, size = 0x40000, scoped, tag = 'input window, operand 2, single buffered']
    #allocation4 [shape = 's32[2]{0}', space=sflag, size = 0x8, scoped, tag = 'scoped memory for dkt_forward.1']
    #allocation5 [shape = 'u8[65536]{0}', space=vmem, size = 0x10000, scoped, tag = 'input window, operand 4, single buffered']
    #allocation6 [shape = 's32[1]{0}', space=sflag, size = 0x4, scoped, tag = 'scoped memory for dkt_forward.1']
    %16 = vsyncpa [#allocation4], 0
    %17 = vsyncpa [#allocation6], 0
    loop: start=0, step=1, limit=4
    $region2: #{dkt_forward.1} parent=1 // loop_pre_header
      _
    $region3: #{dkt_forward.1} parent=1 // loop_header
      %s19 = sphi 0, %s23
      %p20 = scmp.ge.s32.totalorder %s19, 4
      %s26 = sphi 0, %s38
      %s27 = sphi 0, %s34
      %s28 = sphi 0, %s26
      %s29 = sphi 0, %s27
      %s30 = sphi 0, %s28
      %s31 = sphi 0, %s29
      %s43 = sphi 0, %s45
      %s46 = sphi 0, %s43
      %s47 = sphi 0, %s46
      %s63 = sphi 0, %s47
      %s67 = sphi 0, %s67
      %s69 = sphi 0, %s67
      %s70 = sphi 0, %s69
      %s84 = sphi 0, %s70
      %s88 = sphi 0, %s88
      %s90 = sphi 0, %s88
      %s91 = sphi 0, %s90
      %s105 = sphi 0, %s91
      %s109 = sphi 0, %s109
      %s111 = sphi 0, %s109
      %s112 = sphi 0, %s111
      %s126 = sphi 0, %s112
      %s130 = sphi 0, %s130
      %s132 = sphi 0, %s130
      %s133 = sphi 0, %s132
      %s147 = sphi 0, %s133
      %s151 = sphi 0, %s151
      %s153 = sphi 0, %s151
      %s154 = sphi 0, %s153
      %s168 = sphi 0, %s154
      %s174 = sphi 0, %s176
      %s177 = sphi 0, %s174
      %s178 = sphi 0, %s177
      %s194 = sphi 0, %s178
      %s200 = sphi 0, %s202
      %s203 = sphi 0, %s200
      %s204 = sphi 0, %s203
      %s220 = sphi 0, %s204
      %s228 = sphi 0, %s230
      %s231 = sphi 0, %s228
      %s232 = sphi 0, %s231
      %s248 = sphi 0, %s232
      %s254 = sphi 0, %s256
      %s257 = sphi 0, %s254
      %s258 = sphi 0, %s257
      %s274 = sphi 0, %s258
      %s280 = sphi 0, %s282
      %s283 = sphi 0, %s280
      %s284 = sphi 0, %s283
      %s300 = sphi 0, %s284
    $region4: #{dkt_forward.1} parent=1 // loop_header_branch
      %22 = sbr.rel (%p20) target = $region8
    $region5: #{dkt_forward.1} parent=1 // loop_body
      %s24 = ssub.s32 %s19, 1
      %s25 = ssub.s32 %s19, 2
      %s32 = sadd.s32 1, %s27
      %p33 = scmp.ge.s32.totalorder %s32, 2
      %s34 = scalar_select %p33, 0, %s32
      %s35 = sadd.s32 1, %s26
      %s36 = scalar_select %p33, %s35, %s26
      %p37 = scmp.ge.s32.totalorder %s36, 1
      %s38 = scalar_select %p37, 0, %s36
      %s39 = ssub.s32 %s26, %s38
      %s40 = ssub.s32 %s27, %s34
      %s41 = sor.u32 %s39, %s40
      %p42 = scmp.eq.s32.totalorder %s41, 0
      %s44 = sadd.s32 %s43, 1
      %s45 = scalar_select %p42, %s43, %s44
      %p48 = pneg %p42
      %p49 = scmp.eq.s32.totalorder %s19, 1
      %p50 = por %p48, %p49
      %p51 = scmp.ne.s32.totalorder %s43, %s46
      %p52 = scmp.eq.s32.totalorder %s19, 0
      %p53 = por %p51, %p52
      %p54 = scmp.ne.s32.totalorder %s43, %s46
      %p55 = scmp.eq.s32.totalorder %s24, 1
      %p56 = por %p54, %p55
      %p57 = scmp.ne.s32.totalorder %s46, %s47
      %p58 = scmp.eq.s32.totalorder %s24, 0
      %p59 = por %p57, %p58
      %p60 = scmp.ne.s32.totalorder %s46, %s47
      %p61 = scmp.eq.s32.totalorder %s25, 1
      %p62 = por %p60, %p61
      %p64 = scmp.ne.s32.totalorder %s47, %s63
      %p65 = scmp.eq.s32.totalorder %s25, 0
      %p66 = por %p64, %p65
      %s68 = sadd.s32 %s67, 1
      %p71 = scmp.eq.s32.totalorder %s19, 1
      %p72 = scmp.ne.s32.totalorder %s67, %s69
      %p73 = scmp.eq.s32.totalorder %s19, 0
      %p74 = por %p72, %p73
      %p75 = scmp.ne.s32.totalorder %s67, %s69
      %p76 = scmp.eq.s32.totalorder %s24, 1
      %p77 = por %p75, %p76
      %p78 = scmp.ne.s32.totalorder %s69, %s70
      %p79 = scmp.eq.s32.totalorder %s24, 0
      %p80 = por %p78, %p79
      %p81 = scmp.ne.s32.totalorder %s69, %s70
      %p82 = scmp.eq.s32.totalorder %s25, 1
      %p83 = por %p81, %p82
      %p85 = scmp.ne.s32.totalorder %s70, %s84
      %p86 = scmp.eq.s32.totalorder %s25, 0
      %p87 = por %p85, %p86
      %s89 = sadd.s32 %s88, 1
      %p92 = scmp.eq.s32.totalorder %s19, 1
      %p93 = scmp.ne.s32.totalorder %s88, %s90
      %p94 = scmp.eq.s32.totalorder %s19, 0
      %p95 = por %p93, %p94
      %p96 = scmp.ne.s32.totalorder %s88, %s90
      %p97 = scmp.eq.s32.totalorder %s24, 1
      %p98 = por %p96, %p97
      %p99 = scmp.ne.s32.totalorder %s90, %s91
      %p100 = scmp.eq.s32.totalorder %s24, 0
      %p101 = por %p99, %p100
      %p102 = scmp.ne.s32.totalorder %s90, %s91
      %p103 = scmp.eq.s32.totalorder %s25, 1
      %p104 = por %p102, %p103
      %p106 = scmp.ne.s32.totalorder %s91, %s105
      %p107 = scmp.eq.s32.totalorder %s25, 0
      %p108 = por %p106, %p107
      %s110 = sadd.s32 %s109, 1
      %p113 = scmp.eq.s32.totalorder %s19, 1
      %p114 = scmp.ne.s32.totalorder %s109, %s111
      %p115 = scmp.eq.s32.totalorder %s19, 0
      %p116 = por %p114, %p115
      %p117 = scmp.ne.s32.totalorder %s109, %s111
      %p118 = scmp.eq.s32.totalorder %s24, 1
      %p119 = por %p117, %p118
      %p120 = scmp.ne.s32.totalorder %s111, %s112
      %p121 = scmp.eq.s32.totalorder %s24, 0
      %p122 = por %p120, %p121
      %p123 = scmp.ne.s32.totalorder %s111, %s112
      %p124 = scmp.eq.s32.totalorder %s25, 1
      %p125 = por %p123, %p124
      %p127 = scmp.ne.s32.totalorder %s112, %s126
      %p128 = scmp.eq.s32.totalorder %s25, 0
      %p129 = por %p127, %p128
      %s131 = sadd.s32 %s130, 1
      %p134 = scmp.eq.s32.totalorder %s19, 1
      %p135 = scmp.ne.s32.totalorder %s130, %s132
      %p136 = scmp.eq.s32.totalorder %s19, 0
      %p137 = por %p135, %p136
      %p138 = scmp.ne.s32.totalorder %s130, %s132
      %p139 = scmp.eq.s32.totalorder %s24, 1
      %p140 = por %p138, %p139
      %p141 = scmp.ne.s32.totalorder %s132, %s133
      %p142 = scmp.eq.s32.totalorder %s24, 0
      %p143 = por %p141, %p142
      %p144 = scmp.ne.s32.totalorder %s132, %s133
      %p145 = scmp.eq.s32.totalorder %s25, 1
      %p146 = por %p144, %p145
      %p148 = scmp.ne.s32.totalorder %s133, %s147
      %p149 = scmp.eq.s32.totalorder %s25, 0
      %p150 = por %p148, %p149
      %s152 = sadd.s32 %s151, 1
      %p155 = scmp.eq.s32.totalorder %s19, 1
      %p156 = scmp.ne.s32.totalorder %s151, %s153
      %p157 = scmp.eq.s32.totalorder %s19, 0
      %p158 = por %p156, %p157
      %p159 = scmp.ne.s32.totalorder %s151, %s153
      %p160 = scmp.eq.s32.totalorder %s24, 1
      %p161 = por %p159, %p160
      %p162 = scmp.ne.s32.totalorder %s153, %s154
      %p163 = scmp.eq.s32.totalorder %s24, 0
      %p164 = por %p162, %p163
      %p165 = scmp.ne.s32.totalorder %s153, %s154
      %p166 = scmp.eq.s32.totalorder %s25, 1
      %p167 = por %p165, %p166
      %p169 = scmp.ne.s32.totalorder %s154, %s168
      %p170 = scmp.eq.s32.totalorder %s25, 0
      %p171 = por %p169, %p170
      %s172 = ssub.s32 %s26, %s38
      %p173 = scmp.eq.s32.totalorder %s172, 0
      %s175 = sadd.s32 %s174, 1
      %s176 = scalar_select %p173, %s174, %s175
      %p179 = pneg %p173
      %p180 = scmp.eq.s32.totalorder %s19, 1
      %p181 = por %p179, %p180
      %p182 = scmp.ne.s32.totalorder %s174, %s177
      %p183 = scmp.eq.s32.totalorder %s19, 0
      %p184 = por %p182, %p183
      %p185 = scmp.ne.s32.totalorder %s174, %s177
      %p186 = scmp.eq.s32.totalorder %s24, 1
      %p187 = por %p185, %p186
      %p188 = scmp.ne.s32.totalorder %s177, %s178
      %p189 = scmp.eq.s32.totalorder %s24, 0
      %p190 = por %p188, %p189
      %p191 = scmp.ne.s32.totalorder %s177, %s178
      %p192 = scmp.eq.s32.totalorder %s25, 1
      %p193 = por %p191, %p192
      %p195 = scmp.ne.s32.totalorder %s178, %s194
      %p196 = scmp.eq.s32.totalorder %s25, 0
      %p197 = por %p195, %p196
      %s198 = ssub.s32 %s26, %s38
      %p199 = scmp.eq.s32.totalorder %s198, 0
      %s201 = sadd.s32 %s200, 1
      %s202 = scalar_select %p199, %s200, %s201
      %p205 = pneg %p199
      %p206 = scmp.eq.s32.totalorder %s19, 1
      %p207 = por %p205, %p206
      %p208 = scmp.ne.s32.totalorder %s200, %s203
      %p209 = scmp.eq.s32.totalorder %s19, 0
      %p210 = por %p208, %p209
      %p211 = scmp.ne.s32.totalorder %s200, %s203
      %p212 = scmp.eq.s32.totalorder %s24, 1
      %p213 = por %p211, %p212
      %p214 = scmp.ne.s32.totalorder %s203, %s204
      %p215 = scmp.eq.s32.totalorder %s24, 0
      %p216 = por %p214, %p215
      %p217 = scmp.ne.s32.totalorder %s203, %s204
      %p218 = scmp.eq.s32.totalorder %s25, 1
      %p219 = por %p217, %p218
      %p221 = scmp.ne.s32.totalorder %s204, %s220
      %p222 = scmp.eq.s32.totalorder %s25, 0
      %p223 = por %p221, %p222
      %s224 = ssub.s32 %s26, %s38
      %s225 = ssub.s32 %s27, %s34
      %s226 = sor.u32 %s224, %s225
      %p227 = scmp.eq.s32.totalorder %s226, 0
      %s229 = sadd.s32 %s228, 1
      %s230 = scalar_select %p227, %s228, %s229
      %p233 = pneg %p227
      %p234 = scmp.eq.s32.totalorder %s19, 1
      %p235 = por %p233, %p234
      %p236 = scmp.ne.s32.totalorder %s228, %s231
      %p237 = scmp.eq.s32.totalorder %s19, 0
      %p238 = por %p236, %p237
      %p239 = scmp.ne.s32.totalorder %s228, %s231
      %p240 = scmp.eq.s32.totalorder %s24, 1
      %p241 = por %p239, %p240
      %p242 = scmp.ne.s32.totalorder %s231, %s232
      %p243 = scmp.eq.s32.totalorder %s24, 0
      %p244 = por %p242, %p243
      %p245 = scmp.ne.s32.totalorder %s231, %s232
      %p246 = scmp.eq.s32.totalorder %s25, 1
      %p247 = por %p245, %p246
      %p249 = scmp.ne.s32.totalorder %s232, %s248
      %p250 = scmp.eq.s32.totalorder %s25, 0
      %p251 = por %p249, %p250
      %s252 = ssub.s32 %s26, %s38
      %p253 = scmp.eq.s32.totalorder %s252, 0
      %s255 = sadd.s32 %s254, 1
      %s256 = scalar_select %p253, %s254, %s255
      %p259 = pneg %p253
      %p260 = scmp.eq.s32.totalorder %s19, 1
      %p261 = por %p259, %p260
      %p262 = scmp.ne.s32.totalorder %s254, %s257
      %p263 = scmp.eq.s32.totalorder %s19, 0
      %p264 = por %p262, %p263
      %p265 = scmp.ne.s32.totalorder %s254, %s257
      %p266 = scmp.eq.s32.totalorder %s24, 1
      %p267 = por %p265, %p266
      %p268 = scmp.ne.s32.totalorder %s257, %s258
      %p269 = scmp.eq.s32.totalorder %s24, 0
      %p270 = por %p268, %p269
      %p271 = scmp.ne.s32.totalorder %s257, %s258
      %p272 = scmp.eq.s32.totalorder %s25, 1
      %p273 = por %p271, %p272
      %p275 = scmp.ne.s32.totalorder %s258, %s274
      %p276 = scmp.eq.s32.totalorder %s25, 0
      %p277 = por %p275, %p276
      %s278 = ssub.s32 %s26, %s38
      %p279 = scmp.eq.s32.totalorder %s278, 0
      %s281 = sadd.s32 %s280, 1
      %s282 = scalar_select %p279, %s280, %s281
      %p285 = pneg %p279
      %p286 = scmp.eq.s32.totalorder %s19, 1
      %p287 = por %p285, %p286
      %p288 = scmp.ne.s32.totalorder %s280, %s283
      %p289 = scmp.eq.s32.totalorder %s19, 0
      %p290 = por %p288, %p289
      %p291 = scmp.ne.s32.totalorder %s280, %s283
      %p292 = scmp.eq.s32.totalorder %s24, 1
      %p293 = por %p291, %p292
      %p294 = scmp.ne.s32.totalorder %s283, %s284
      %p295 = scmp.eq.s32.totalorder %s24, 0
      %p296 = por %p294, %p295
      %p297 = scmp.ne.s32.totalorder %s283, %s284
      %p298 = scmp.eq.s32.totalorder %s25, 1
      %p299 = por %p297, %p298
      %p301 = scmp.ne.s32.totalorder %s284, %s300
      %p302 = scmp.eq.s32.totalorder %s25, 0
      %p303 = por %p301, %p302
      %p304 = scmp.le.s32.totalorder 1, %s19
      %p305 = scmp.lt.s32.totalorder %s19, 3
      %p306 = pnand %p304, %p305
      %p307 = pneg %p306
      // Predicated region
      $region9: #{dkt_forward.1} parent=5 // pred_check
        _
      $region10: #{dkt_forward.1} parent=5 // pred_check_branch
        %309 = sbr.rel (%p306) target = $region12
      $region11: #{dkt_forward.1} parent=5 // pred_region
        %s310 = ssub.s32 %s19, 1
        // Predicated region
        $region13: #{dkt_forward.1} parent=11 // pred_check
          %p311 = pneg %p80
        $region14: #{dkt_forward.1} parent=11 // pred_check_branch
          %313 = sbr.rel (%p311) target = $region16
        $region15: #{dkt_forward.1} parent=11 // pred_region
          _
        $region16: #{dkt_forward.1} parent=11 // pred_fallthru
          _
        // Predicated region
        $region17: #{dkt_forward.1} parent=11 // pred_check
          %p314 = pneg %p101
        $region18: #{dkt_forward.1} parent=11 // pred_check_branch
          %316 = sbr.rel (%p314) target = $region20
        $region19: #{dkt_forward.1} parent=11 // pred_region
          %318 = vsyncadd [#allocation4], 0
          %s319 = sshll.u32 %s2, 4
          %s320 = int_to_ptr.hbm [resolvable:$true] %s319
          %s321 = sshll.u32 [#allocation3], 4
          %s322 = int_to_ptr.vmem [resolvable:$true] %s321
          %327 = dma.hbm_to_vmem [thread:$0]  %s320, 8192, %s322, [#allocation4], 512, 512, 32
        $region20: #{dkt_forward.1} parent=11 // pred_fallthru
          _
        // Predicated region
        $region21: #{dkt_forward.1} parent=11 // pred_check
          %p328 = pneg %p122
        $region22: #{dkt_forward.1} parent=11 // pred_check_branch
          %330 = sbr.rel (%p328) target = $region24
        $region23: #{dkt_forward.1} parent=11 // pred_region
          _
        $region24: #{dkt_forward.1} parent=11 // pred_fallthru
          _
        // Predicated region
        $region25: #{dkt_forward.1} parent=11 // pred_check
          %p331 = pneg %p143
        $region26: #{dkt_forward.1} parent=11 // pred_check_branch
          %333 = sbr.rel (%p331) target = $region28
        $region27: #{dkt_forward.1} parent=11 // pred_region
          %335 = vsyncadd [#allocation6], 0
          %s336 = sshll.u32 %s4, 4
          %s337 = int_to_ptr.hbm [resolvable:$true] %s336
          %s338 = sshll.u32 [#allocation5], 4
          %s339 = int_to_ptr.vmem [resolvable:$true] %s338
          %344 = dma.hbm_to_vmem [thread:$0]  %s337, 2048, %s339, [#allocation6], 128, 128, 8
        $region28: #{dkt_forward.1} parent=11 // pred_fallthru
          _
        // Predicated region
        $region29: #{dkt_forward.1} parent=11 // pred_check
          %p345 = pneg %p164
        $region30: #{dkt_forward.1} parent=11 // pred_check_branch
          %347 = sbr.rel (%p345) target = $region32
        $region31: #{dkt_forward.1} parent=11 // pred_region
          _
        $region32: #{dkt_forward.1} parent=11 // pred_fallthru
          _
        // Predicated region
        $region33: #{dkt_forward.1} parent=11 // pred_check
          %p348 = pneg %p190
        $region34: #{dkt_forward.1} parent=11 // pred_check_branch
          %350 = sbr.rel (%p348) target = $region36
        $region35: #{dkt_forward.1} parent=11 // pred_region
          %p351 = scmp.lt.s32.totalorder %s28, 0
          %s352 = scalar_select %p351, %s28, 0
          %s353 = smul.addr %s352, 8
          %s354 = scalar_lea.vmem %s6, %s353
        $region36: #{dkt_forward.1} parent=11 // pred_fallthru
          _
        // Predicated region
        $region37: #{dkt_forward.1} parent=11 // pred_check
          %p355 = pneg %p216
        $region38: #{dkt_forward.1} parent=11 // pred_check_branch
          %357 = sbr.rel (%p355) target = $region40
        $region39: #{dkt_forward.1} parent=11 // pred_region
          %p358 = scmp.lt.s32.totalorder %s28, 0
          %s359 = scalar_select %p358, %s28, 0
          %s360 = smul.addr %s359, 8
          %s361 = scalar_lea.vmem %s7, %s360
        $region40: #{dkt_forward.1} parent=11 // pred_fallthru
          _
      $region12: #{dkt_forward.1} parent=5 // pred_fallthru
        _
      %p362 = scmp.lt.s32.totalorder %s19, 2
      // Predicated region
      $region41: #{dkt_forward.1} parent=5 // pred_check
        %p363 = pneg %p362
      $region42: #{dkt_forward.1} parent=5 // pred_check_branch
        %365 = sbr.rel (%p363) target = $region44
      $region43: #{dkt_forward.1} parent=5 // pred_region
        // Predicated region
        $region45: #{dkt_forward.1} parent=43 // pred_check
          %p366 = pneg %p53
        $region46: #{dkt_forward.1} parent=43 // pred_check_branch
          %368 = sbr.rel (%p366) target = $region48
        $region47: #{dkt_forward.1} parent=43 // pred_region
          %s369 = smul.u32 4, %s27
          %p370 = scmp.lt.s32.totalorder %s26, 0
          %s371 = scalar_select %p370, %s26, 0
          %p372 = scmp.lt.s32.totalorder %s369, 7
          %s373 = scalar_select %p372, %s369, 7
          %s374 = smul.addr %s371, 8
          %s375 = sadd.s32 %s373, %s374
          %s376 = smul.addr %s375, 8
          %s377 = scalar_lea.vmem %s0, %s376
          %s378 = smul.u32 4, %s27
        $region48: #{dkt_forward.1} parent=43 // pred_fallthru
          _
      $region44: #{dkt_forward.1} parent=5 // pred_fallthru
        _
      %p379 = scmp.le.s32.totalorder 1, %s19
      %p380 = scmp.lt.s32.totalorder %s19, 3
      %p381 = pnand %p379, %p380
      %p382 = pneg %p381
      // Predicated region
      $region49: #{dkt_forward.1} parent=5 // pred_check
        _
      $region50: #{dkt_forward.1} parent=5 // pred_check_branch
        %384 = sbr.rel (%p381) target = $region52
      $region51: #{dkt_forward.1} parent=5 // pred_region
        %s385 = ssub.s32 %s19, 1
        // Predicated region
        $region53: #{dkt_forward.1} parent=51 // pred_check
          %p386 = pneg %p101
        $region54: #{dkt_forward.1} parent=51 // pred_check_branch
          %388 = sbr.rel (%p386) target = $region56
        $region55: #{dkt_forward.1} parent=51 // pred_region
          %390 = dma.done [#allocation4], 8192
        $region56: #{dkt_forward.1} parent=51 // pred_fallthru
          _
        // Predicated region
        $region57: #{dkt_forward.1} parent=51 // pred_check
          %p391 = pneg %p143
        $region58: #{dkt_forward.1} parent=51 // pred_check_branch
          %393 = sbr.rel (%p391) target = $region60
        $region59: #{dkt_forward.1} parent=51 // pred_region
          %395 = dma.done [#allocation6], 2048
        $region60: #{dkt_forward.1} parent=51 // pred_fallthru
          _
        %s396 = smul.u32 4, %s29
        %p397 = scmp.lt.s32.totalorder %s28, 0
        %s398 = scalar_select %p397, %s28, 0
        %p399 = scmp.lt.s32.totalorder %s396, 7
        %s400 = scalar_select %p399, %s396, 7
        %s401 = smul.addr %s398, 8
        %s402 = sadd.s32 %s400, %s401
        %s403 = smul.addr %s402, 8
        %s404 = scalar_lea.vmem %s0, %s403
        %p405 = pneg %p59
        %p406 = pneg %p56
        %p407 = pneg %p80
        %p408 = pneg %p77
        %p409 = pneg %p101
        %p410 = pneg %p98
        %p411 = pneg %p122
        %p412 = pneg %p119
        %p413 = pneg %p143
        %p414 = pneg %p140
        %p415 = pneg %p164
        %p416 = pneg %p161
        %p417 = scmp.lt.s32.totalorder %s28, 0
        %s418 = scalar_select %p417, %s28, 0
        %s419 = smul.addr %s418, 8
        %s420 = scalar_lea.vmem %s6, %s419
        %p421 = pneg %p190
        %p422 = pneg %p187
        %p423 = scmp.lt.s32.totalorder %s28, 0
        %s424 = scalar_select %p423, %s28, 0
        %s425 = smul.addr %s424, 8
        %s426 = scalar_lea.vmem %s7, %s425
        %p427 = pneg %p216
        %p428 = pneg %p213
        %p429 = pneg %p244
        %p430 = pneg %p241
        %s431 = smul.u32 4, %s29
        %p432 = scmp.lt.s32.totalorder %s28, 0
        %s433 = scalar_select %p432, %s28, 0
        %p434 = scmp.lt.s32.totalorder %s431, 7
        %s435 = scalar_select %p434, %s431, 7
        %s436 = smul.addr %s433, 8
        %s437 = sadd.s32 %s435, %s436
        %s438 = smul.addr %s437, 8
        %s439 = scalar_lea.vmem %s8, %s438
        %p440 = pneg %p270
        %p441 = pneg %p267
        %p442 = scmp.lt.s32.totalorder %s28, 0
        %s443 = scalar_select %p442, %s28, 0
        %s444 = smul.addr %s443, 8
        %s445 = scalar_lea.vmem %s9, %s444
        %p446 = pneg %p296
        %p447 = pneg %p293
        %p448 = scmp.lt.s32.totalorder %s28, 0
        %s449 = scalar_select %p448, %s28, 0
        %s450 = smul.addr %s449, 8
        %s451 = scalar_lea.vmem %s10, %s450
        %s452 = smul.u32 4, %s29
        %p453 = scmp.lt.s32.totalorder %s28, 0
        %s454 = scalar_select %p453, %s28, 0
        %p455 = scmp.lt.s32.totalorder %s452, 7
        %s456 = scalar_select %p455, %s452, 7
        %s457 = smul.addr %s454, 8
        %s458 = sadd.s32 %s456, %s457
        %s459 = smul.addr %s458, 8
        %s460 = scalar_lea.vmem %s0, %s459
        %s461 = smul.u32 4, %s29
        %p462 = scmp.lt.s32.totalorder %s28, 0
        %s463 = scalar_select %p462, %s28, 0
        %s464 = smul.addr %s463, 8
        %s465 = scalar_lea.vmem %s6, %s464
        %p466 = scmp.lt.s32.totalorder %s28, 0
        %s467 = scalar_select %p466, %s28, 0
        %s468 = smul.addr %s467, 8
        %s469 = scalar_lea.vmem %s7, %s468
        %s470 = smul.u32 4, %s29
        %p471 = scmp.lt.s32.totalorder %s28, 0
        %s472 = scalar_select %p471, %s28, 0
        %p473 = scmp.lt.s32.totalorder %s470, 7
        %s474 = scalar_select %p473, %s470, 7
        %s475 = smul.addr %s472, 8
        %s476 = sadd.s32 %s474, %s475
        %s477 = smul.addr %s476, 8
        %s478 = scalar_lea.vmem %s8, %s477
        %s479 = smul.u32 4, %s29
        %p480 = scmp.lt.s32.totalorder %s28, 0
        %s481 = scalar_select %p480, %s28, 0
        %s482 = smul.addr %s481, 8
        %s483 = scalar_lea.vmem %s9, %s482
        %p484 = scmp.lt.s32.totalorder %s28, 0
        %s485 = scalar_select %p484, %s28, 0
        %s486 = smul.addr %s485, 8
        %s487 = scalar_lea.vmem %s10, %s486
        %p488 = scmp.eq.s32.totalorder %s29, 0
        // Predicated region
        $region61: #{dkt_forward.1} parent=51 // pred_check
          %p489 = pneg %p488
        $region62: #{dkt_forward.1} parent=51 // pred_check_branch
          %491 = sbr.rel (%p489) target = $region64
        $region63: #{dkt_forward.1} parent=51 // pred_region
          %v492 = vld [vmem:[%s465] sm:$0xff]
          %493 = vst [vmem:[%s483] sm:$0xff] %v492
          %v494 = vld [vmem:[%s469] sm:$0xff]
          %495 = vst [vmem:[%s487] sm:$0xff] %v494
        $region64: #{dkt_forward.1} parent=51 // pred_fallthru
          _
        %v496 = vld [vmem:[%s460] sm:$0xff]
        %v497 = vld [vmem:[%s460 + $0x8] sm:$0xff]
        %v498 = vld [vmem:[%s460 + $0x10] sm:$0xff]
        %v499 = vld [vmem:[%s460 + $0x18] sm:$0xff]
        %v500 = vld [vmem:[%s1] sm:$0xff]
        %v501 = vld [vmem:[%s1 + $0x8] sm:$0xff]
        %v502 = vld [vmem:[%s1 + $0x10] sm:$0xff]
        %v503 = vld [vmem:[%s1 + $0x18] sm:$0xff]
        %v504 = vld [vmem:[%s1 + $0x20] sm:$0xff]
        %v505 = vld [vmem:[%s1 + $0x28] sm:$0xff]
        %v506 = vld [vmem:[%s1 + $0x30] sm:$0xff]
        %v507 = vld [vmem:[%s1 + $0x38] sm:$0xff]
        %v508 = vld [vmem:[%s1 + $0x40] sm:$0xff]
        %v509 = vld [vmem:[%s1 + $0x48] sm:$0xff]
        %v510 = vld [vmem:[%s1 + $0x50] sm:$0xff]
        %v511 = vld [vmem:[%s1 + $0x58] sm:$0xff]
        %v512 = vld [vmem:[%s1 + $0x60] sm:$0xff]
        %v513 = vld [vmem:[%s1 + $0x68] sm:$0xff]
        %v514 = vld [vmem:[%s1 + $0x70] sm:$0xff]
        %v515 = vld [vmem:[%s1 + $0x78] sm:$0xff]
        %v516 = vld [vmem:[%s3] sm:$0xf]
        %v518 = vperm.slane %v516, 0
        %v519 = vperm.slane %v516, 1
        %v520 = vperm.slane %v516, 2
        %v521 = vperm.slane %v516, 3
        %vm526 = vcmask 261120
        %v528 = vsel %vm526, %v496, 0
        %v531 = vsel %vm526, %v497, 0
        %v534 = vsel %vm526, %v498, 0
        %v537 = vsel %vm526, %v499, 0
        %539 = vmatpush.msra.mxu0 0.0
        %540 = vmatpush.msra.mxu0 0.0
        %541 = vmatpush.msra.mxu0 0.0
        %542 = vmatpush.msra.mxu0 0.0
        %543 = vmatpush.msra.mxu0 0.0
        %544 = vmatpush.msra.mxu0 0.0
        %545 = vmatpush.msra.mxu0 0.0
        %546 = vmatpush.msra.mxu0 0.0
        %547 = vmatpush.msra.mxu0 0.0
        %548 = vmatpush.msra.mxu0 0.0
        %549 = vmatpush.msra.mxu0 0.0
        %550 = vmatpush.msra.mxu0 0.0
        %551 = vmatpush.msra.mxu0 %v512
        %552 = vmatpush.msra.mxu0 %v508
        %553 = vmatpush.msra.mxu0 %v504
        %554 = vmatpush.msra.mxu0 %v500
        %555 = vmatmul.f32.gmra.mxu0 %v528
        %v556 = vpop.f32.mrf.mxu0
        %v557 = vadd.f32 %v518, %v556
        %558 = vmatmul.f32.gmra.mxu0 %v531
        %v559 = vpop.f32.mrf.mxu0
        %v560 = vadd.f32 %v518, %v559
        %561 = vmatmul.f32.gmra.mxu0 %v534
        %v562 = vpop.f32.mrf.mxu0
        %v563 = vadd.f32 %v518, %v562
        %564 = vmatmul.f32.gmra.mxu0 %v537
        %v565 = vpop.f32.mrf.mxu0
        %v566 = vadd.f32 %v518, %v565
        %567 = vdwg.mxu0
        %568 = vmatpush.msra.mxu0 0.0
        %569 = vmatpush.msra.mxu0 0.0
        %570 = vmatpush.msra.mxu0 0.0
        %571 = vmatpush.msra.mxu0 0.0
        %572 = vmatpush.msra.mxu0 0.0
        %573 = vmatpush.msra.mxu0 0.0
        %574 = vmatpush.msra.mxu0 0.0
        %575 = vmatpush.msra.mxu0 0.0
        %576 = vmatpush.msra.mxu0 0.0
        %577 = vmatpush.msra.mxu0 0.0
        %578 = vmatpush.msra.mxu0 0.0
        %579 = vmatpush.msra.mxu0 0.0
        %580 = vmatpush.msra.mxu0 %v513
        %581 = vmatpush.msra.mxu0 %v509
        %582 = vmatpush.msra.mxu0 %v505
        %583 = vmatpush.msra.mxu0 %v501
        %584 = vmatmul.f32.gmra.mxu0 %v528
        %v585 = vpop.f32.mrf.mxu0
        %v586 = vadd.f32 %v519, %v585
        %587 = vmatmul.f32.gmra.mxu0 %v531
        %v588 = vpop.f32.mrf.mxu0
        %v589 = vadd.f32 %v519, %v588
        %590 = vmatmul.f32.gmra.mxu0 %v534
        %v591 = vpop.f32.mrf.mxu0
        %v592 = vadd.f32 %v519, %v591
        %593 = vmatmul.f32.gmra.mxu0 %v537
        %v594 = vpop.f32.mrf.mxu0
        %v595 = vadd.f32 %v519, %v594
        %596 = vdwg.mxu0
        %597 = vmatpush.msra.mxu0 0.0
        %598 = vmatpush.msra.mxu0 0.0
        %599 = vmatpush.msra.mxu0 0.0
        %600 = vmatpush.msra.mxu0 0.0
        %601 = vmatpush.msra.mxu0 0.0
        %602 = vmatpush.msra.mxu0 0.0
        %603 = vmatpush.msra.mxu0 0.0
        %604 = vmatpush.msra.mxu0 0.0
        %605 = vmatpush.msra.mxu0 0.0
        %606 = vmatpush.msra.mxu0 0.0
        %607 = vmatpush.msra.mxu0 0.0
        %608 = vmatpush.msra.mxu0 0.0
        %609 = vmatpush.msra.mxu0 %v514
        %610 = vmatpush.msra.mxu0 %v510
        %611 = vmatpush.msra.mxu0 %v506
        %612 = vmatpush.msra.mxu0 %v502
        %613 = vmatmul.f32.gmra.mxu0 %v528
        %v614 = vpop.f32.mrf.mxu0
        %v615 = vadd.f32 %v520, %v614
        %616 = vmatmul.f32.gmra.mxu0 %v531
        %v617 = vpop.f32.mrf.mxu0
        %v618 = vadd.f32 %v520, %v617
        %619 = vmatmul.f32.gmra.mxu0 %v534
        %v620 = vpop.f32.mrf.mxu0
        %v621 = vadd.f32 %v520, %v620
        %622 = vmatmul.f32.gmra.mxu0 %v537
        %v623 = vpop.f32.mrf.mxu0
        %v624 = vadd.f32 %v520, %v623
        %625 = vdwg.mxu0
        %626 = vmatpush.msra.mxu0 0.0
        %627 = vmatpush.msra.mxu0 0.0
        %628 = vmatpush.msra.mxu0 0.0
        %629 = vmatpush.msra.mxu0 0.0
        %630 = vmatpush.msra.mxu0 0.0
        %631 = vmatpush.msra.mxu0 0.0
        %632 = vmatpush.msra.mxu0 0.0
        %633 = vmatpush.msra.mxu0 0.0
        %634 = vmatpush.msra.mxu0 0.0
        %635 = vmatpush.msra.mxu0 0.0
        %636 = vmatpush.msra.mxu0 0.0
        %637 = vmatpush.msra.mxu0 0.0
        %638 = vmatpush.msra.mxu0 %v515
        %639 = vmatpush.msra.mxu0 %v511
        %640 = vmatpush.msra.mxu0 %v507
        %641 = vmatpush.msra.mxu0 %v503
        %642 = vmatmul.f32.gmra.mxu0 %v528
        %v643 = vpop.f32.mrf.mxu0
        %v644 = vadd.f32 %v521, %v643
        %645 = vmatmul.f32.gmra.mxu0 %v531
        %v646 = vpop.f32.mrf.mxu0
        %v647 = vadd.f32 %v521, %v646
        %648 = vmatmul.f32.gmra.mxu0 %v534
        %v649 = vpop.f32.mrf.mxu0
        %v650 = vadd.f32 %v521, %v649
        %651 = vmatmul.f32.gmra.mxu0 %v537
        %v652 = vpop.f32.mrf.mxu0
        %v653 = vadd.f32 %v521, %v652
        %654 = vdwg.mxu0
        %655 = vst [vmem:[#allocation2] sm:$0xff] %v557
        %656 = vst [vmem:[#allocation2 + $0x8] sm:$0xff] %v586
        %657 = vst [vmem:[#allocation2 + $0x10] sm:$0xff] %v615
        %658 = vst [vmem:[#allocation2 + $0x18] sm:$0xff] %v644
        %659 = vst [vmem:[#allocation2 + $0x20] sm:$0xff] %v560
        %660 = vst [vmem:[#allocation2 + $0x28] sm:$0xff] %v589
        %661 = vst [vmem:[#allocation2 + $0x30] sm:$0xff] %v618
        %662 = vst [vmem:[#allocation2 + $0x38] sm:$0xff] %v647
        %663 = vst [vmem:[#allocation2 + $0x40] sm:$0xff] %v563
        %664 = vst [vmem:[#allocation2 + $0x48] sm:$0xff] %v592
        %665 = vst [vmem:[#allocation2 + $0x50] sm:$0xff] %v621
        %666 = vst [vmem:[#allocation2 + $0x58] sm:$0xff] %v650
        %667 = vst [vmem:[#allocation2 + $0x60] sm:$0xff] %v566
        %668 = vst [vmem:[#allocation2 + $0x68] sm:$0xff] %v595
        %669 = vst [vmem:[#allocation2 + $0x70] sm:$0xff] %v624
        %670 = vst [vmem:[#allocation2 + $0x78] sm:$0xff] %v653
        %v671 = vld [vmem:[%s483] sm:$0xff]
        %v672 = vld [vmem:[%s487] sm:$0xff]
        %s673 = smul.u32 0, 4
        %s674 = smul.addr %s673, 8
        %s675 = scalar_lea.vmem [#allocation2], %s674
        %v676 = vld [vmem:[%s675] sm:$0xff]
        %v677 = vld [vmem:[%s675 + $0x8] sm:$0xff]
        %v678 = vld [vmem:[%s675 + $0x10] sm:$0xff]
        %v679 = vld [vmem:[%s675 + $0x18] sm:$0xff]
        %v680 = vld [vmem:[#allocation3] sm:$0xff]
        %v681 = vld [vmem:[#allocation3 + $0x8] sm:$0xff]
        %v682 = vld [vmem:[#allocation3 + $0x10] sm:$0xff]
        %v683 = vld [vmem:[#allocation3 + $0x18] sm:$0xff]
        %v684 = vld [vmem:[#allocation3 + $0x20] sm:$0xff]
        %v685 = vld [vmem:[#allocation3 + $0x28] sm:$0xff]
        %v686 = vld [vmem:[#allocation3 + $0x30] sm:$0xff]
        %v687 = vld [vmem:[#allocation3 + $0x38] sm:$0xff]
        %v688 = vld [vmem:[#allocation3 + $0x40] sm:$0xff]
        %v689 = vld [vmem:[#allocation3 + $0x48] sm:$0xff]
        %v690 = vld [vmem:[#allocation3 + $0x50] sm:$0xff]
        %v691 = vld [vmem:[#allocation3 + $0x58] sm:$0xff]
        %v692 = vld [vmem:[#allocation3 + $0x60] sm:$0xff]
        %v693 = vld [vmem:[#allocation3 + $0x68] sm:$0xff]
        %v694 = vld [vmem:[#allocation3 + $0x70] sm:$0xff]
        %v695 = vld [vmem:[#allocation3 + $0x78] sm:$0xff]
        %v696 = vld [vmem:[#allocation3 + $0x80] sm:$0xff]
        %v697 = vld [vmem:[#allocation3 + $0x88] sm:$0xff]
        %v698 = vld [vmem:[#allocation3 + $0x90] sm:$0xff]
        %v699 = vld [vmem:[#allocation3 + $0x98] sm:$0xff]
        %v700 = vld [vmem:[#allocation3 + $0xa0] sm:$0xff]
        %v701 = vld [vmem:[#allocation3 + $0xa8] sm:$0xff]
        %v702 = vld [vmem:[#allocation3 + $0xb0] sm:$0xff]
        %v703 = vld [vmem:[#allocation3 + $0xb8] sm:$0xff]
        %v704 = vld [vmem:[#allocation3 + $0xc0] sm:$0xff]
        %v705 = vld [vmem:[#allocation3 + $0xc8] sm:$0xff]
        %v706 = vld [vmem:[#allocation3 + $0xd0] sm:$0xff]
        %v707 = vld [vmem:[#allocation3 + $0xd8] sm:$0xff]
        %v708 = vld [vmem:[#allocation3 + $0xe0] sm:$0xff]
        %v709 = vld [vmem:[#allocation3 + $0xe8] sm:$0xff]
        %v710 = vld [vmem:[#allocation3 + $0xf0] sm:$0xff]
        %v711 = vld [vmem:[#allocation3 + $0xf8] sm:$0xff]
        %v712 = vld [vmem:[#allocation3 + $0x100] sm:$0xff]
        %v713 = vld [vmem:[#allocation3 + $0x108] sm:$0xff]
        %v714 = vld [vmem:[#allocation3 + $0x110] sm:$0xff]
        %v715 = vld [vmem:[#allocation3 + $0x118] sm:$0xff]
        %v716 = vld [vmem:[#allocation3 + $0x120] sm:$0xff]
        %v717 = vld [vmem:[#allocation3 + $0x128] sm:$0xff]
        %v718 = vld [vmem:[#allocation3 + $0x130] sm:$0xff]
        %v719 = vld [vmem:[#allocation3 + $0x138] sm:$0xff]
        %v720 = vld [vmem:[#allocation3 + $0x140] sm:$0xff]
        %v721 = vld [vmem:[#allocation3 + $0x148] sm:$0xff]
        %v722 = vld [vmem:[#allocation3 + $0x150] sm:$0xff]
        %v723 = vld [vmem:[#allocation3 + $0x158] sm:$0xff]
        %v724 = vld [vmem:[#allocation3 + $0x160] sm:$0xff]
        %v725 = vld [vmem:[#allocation3 + $0x168] sm:$0xff]
        %v726 = vld [vmem:[#allocation3 + $0x170] sm:$0xff]
        %v727 = vld [vmem:[#allocation3 + $0x178] sm:$0xff]
        %v728 = vld [vmem:[#allocation3 + $0x180] sm:$0xff]
        %v729 = vld [vmem:[#allocation3 + $0x188] sm:$0xff]
        %v730 = vld [vmem:[#allocation3 + $0x190] sm:$0xff]
        %v731 = vld [vmem:[#allocation3 + $0x198] sm:$0xff]
        %v732 = vld [vmem:[#allocation3 + $0x1a0] sm:$0xff]
        %v733 = vld [vmem:[#allocation3 + $0x1a8] sm:$0xff]
        %v734 = vld [vmem:[#allocation3 + $0x1b0] sm:$0xff]
        %v735 = vld [vmem:[#allocation3 + $0x1b8] sm:$0xff]
        %v736 = vld [vmem:[#allocation3 + $0x1c0] sm:$0xff]
        %v737 = vld [vmem:[#allocation3 + $0x1c8] sm:$0xff]
        %v738 = vld [vmem:[#allocation3 + $0x1d0] sm:$0xff]
        %v739 = vld [vmem:[#allocation3 + $0x1d8] sm:$0xff]
        %v740 = vld [vmem:[#allocation3 + $0x1e0] sm:$0xff]
        %v741 = vld [vmem:[#allocation3 + $0x1e8] sm:$0xff]
        %v742 = vld [vmem:[#allocation3 + $0x1f0] sm:$0xff]
        %v743 = vld [vmem:[#allocation3 + $0x1f8] sm:$0xff]
        %744 = vmatpush.msra.mxu0 %v740
        %745 = vmatpush.msra.mxu0 %v736
        %746 = vmatpush.msra.mxu0 %v732
        %747 = vmatpush.msra.mxu0 %v728
        %748 = vmatpush.msra.mxu0 %v724
        %749 = vmatpush.msra.mxu0 %v720
        %750 = vmatpush.msra.mxu0 %v716
        %751 = vmatpush.msra.mxu0 %v712
        %752 = vmatpush.msra.mxu0 %v708
        %753 = vmatpush.msra.mxu0 %v704
        %754 = vmatpush.msra.mxu0 %v700
        %755 = vmatpush.msra.mxu0 %v696
        %756 = vmatpush.msra.mxu0 %v692
        %757 = vmatpush.msra.mxu0 %v688
        %758 = vmatpush.msra.mxu0 %v684
        %759 = vmatpush.msra.mxu0 %v680
        %760 = vmatmul.f32.gmra.mxu0 %v671
        %v761 = vpop.f32.mrf.mxu0
        %v762 = vadd.f32 0.0, %v761
        %763 = vdwg.mxu0
        %764 = vmatpush.msra.mxu0 %v741
        %765 = vmatpush.msra.mxu0 %v737
        %766 = vmatpush.msra.mxu0 %v733
        %767 = vmatpush.msra.mxu0 %v729
        %768 = vmatpush.msra.mxu0 %v725
        %769 = vmatpush.msra.mxu0 %v721
        %770 = vmatpush.msra.mxu0 %v717
        %771 = vmatpush.msra.mxu0 %v713
        %772 = vmatpush.msra.mxu0 %v709
        %773 = vmatpush.msra.mxu0 %v705
        %774 = vmatpush.msra.mxu0 %v701
        %775 = vmatpush.msra.mxu0 %v697
        %776 = vmatpush.msra.mxu0 %v693
        %777 = vmatpush.msra.mxu0 %v689
        %778 = vmatpush.msra.mxu0 %v685
        %779 = vmatpush.msra.mxu0 %v681
        %780 = vmatmul.f32.gmra.mxu0 %v671
        %v781 = vpop.f32.mrf.mxu0
        %v782 = vadd.f32 0.0, %v781
        %783 = vdwg.mxu0
        %784 = vmatpush.msra.mxu0 %v742
        %785 = vmatpush.msra.mxu0 %v738
        %786 = vmatpush.msra.mxu0 %v734
        %787 = vmatpush.msra.mxu0 %v730
        %788 = vmatpush.msra.mxu0 %v726
        %789 = vmatpush.msra.mxu0 %v722
        %790 = vmatpush.msra.mxu0 %v718
        %791 = vmatpush.msra.mxu0 %v714
        %792 = vmatpush.msra.mxu0 %v710
        %793 = vmatpush.msra.mxu0 %v706
        %794 = vmatpush.msra.mxu0 %v702
        %795 = vmatpush.msra.mxu0 %v698
        %796 = vmatpush.msra.mxu0 %v694
        %797 = vmatpush.msra.mxu0 %v690
        %798 = vmatpush.msra.mxu0 %v686
        %799 = vmatpush.msra.mxu0 %v682
        %800 = vmatmul.f32.gmra.mxu0 %v671
        %v801 = vpop.f32.mrf.mxu0
        %v802 = vadd.f32 0.0, %v801
        %803 = vdwg.mxu0
        %804 = vmatpush.msra.mxu0 %v743
        %805 = vmatpush.msra.mxu0 %v739
        %806 = vmatpush.msra.mxu0 %v735
        %807 = vmatpush.msra.mxu0 %v731
        %808 = vmatpush.msra.mxu0 %v727
        %809 = vmatpush.msra.mxu0 %v723
        %810 = vmatpush.msra.mxu0 %v719
        %811 = vmatpush.msra.mxu0 %v715
        %812 = vmatpush.msra.mxu0 %v711
        %813 = vmatpush.msra.mxu0 %v707
        %814 = vmatpush.msra.mxu0 %v703
        %815 = vmatpush.msra.mxu0 %v699
        %816 = vmatpush.msra.mxu0 %v695
        %817 = vmatpush.msra.mxu0 %v691
        %818 = vmatpush.msra.mxu0 %v687
        %819 = vmatpush.msra.mxu0 %v683
        %820 = vmatmul.f32.gmra.mxu0 %v671
        %v821 = vpop.f32.mrf.mxu0
        %v822 = vadd.f32 0.0, %v821
        %823 = vdwg.mxu0
        %v824 = vadd.f32 %v676, %v762
        %v825 = vadd.f32 %v677, %v782
        %v826 = vadd.f32 %v678, %v802
        %v827 = vadd.f32 %v679, %v822
        %v828 = vxor.u32 %v824, 2147483648
        %v829 = vmul.f32 %v828, 1.442695
        %v830 = vpow.pop %v829
        %v831 = vadd.f32 %v830, 1.0
        %v832 = vrcp.pop %v831
        %v833 = vmul.f32 %v831, %v832
        %v834 = vsub.f32 1.0, %v833
        %v835 = vmul.f32 %v832, %v834
        %v836 = vadd.f32 %v832, %v835
        %vm837 = vweird.f32 %v831
        %vm838 = vweird.f32 %v832
        %vm839 = vmor %vm837, %vm838
        %v840 = vsel %vm839, %v832, %v836
        %v841 = vand.u32 2147483647, %v831
        %vm842 = vcmp.eq.f32.partialorder %v841, 8.507059e+37
        %v843 = vand.u32 %v831, 2147483648
        %v844 = vor.u32 1.1754944e-38, %v843
        %v845 = vsel %vm842, %v844, %v840
        %v846 = vmul.f32 1.0, %v845
        %v847 = vxor.u32 %v825, 2147483648
        %v848 = vmul.f32 %v847, 1.442695
        %v849 = vpow.pop %v848
        %v850 = vadd.f32 %v849, 1.0
        %v851 = vrcp.pop %v850
        %v852 = vmul.f32 %v850, %v851
        %v853 = vsub.f32 1.0, %v852
        %v854 = vmul.f32 %v851, %v853
        %v855 = vadd.f32 %v851, %v854
        %vm856 = vweird.f32 %v850
        %vm857 = vweird.f32 %v851
        %vm858 = vmor %vm856, %vm857
        %v859 = vsel %vm858, %v851, %v855
        %v860 = vand.u32 2147483647, %v850
        %vm861 = vcmp.eq.f32.partialorder %v860, 8.507059e+37
        %v862 = vand.u32 %v850, 2147483648
        %v863 = vor.u32 1.1754944e-38, %v862
        %v864 = vsel %vm861, %v863, %v859
        %v865 = vmul.f32 1.0, %v864
        %v866 = vtanh.pop %v826
        %v867 = vxor.u32 %v827, 2147483648
        %v868 = vmul.f32 %v867, 1.442695
        %v869 = vpow.pop %v868
        %v870 = vadd.f32 %v869, 1.0
        %v871 = vrcp.pop %v870
        %v872 = vmul.f32 %v870, %v871
        %v873 = vsub.f32 1.0, %v872
        %v874 = vmul.f32 %v871, %v873
        %v875 = vadd.f32 %v871, %v874
        %vm876 = vweird.f32 %v870
        %vm877 = vweird.f32 %v871
        %vm878 = vmor %vm876, %vm877
        %v879 = vsel %vm878, %v871, %v875
        %v880 = vand.u32 2147483647, %v870
        %vm881 = vcmp.eq.f32.partialorder %v880, 8.507059e+37
        %v882 = vand.u32 %v870, 2147483648
        %v883 = vor.u32 1.1754944e-38, %v882
        %v884 = vsel %vm881, %v883, %v879
        %v885 = vmul.f32 1.0, %v884
        %v886 = vmul.f32 %v865, %v672
        %v887 = vmul.f32 %v846, %v866
        %v888 = vadd.f32 %v886, %v887
        %v889 = vtanh.pop %v888
        %v890 = vmul.f32 %v885, %v889
        %891 = vst [vmem:[%s675] sm:$0xff] %v890
        %s892 = smul.u32 1, 4
        %s893 = smul.addr %s892, 8
        %s894 = scalar_lea.vmem [#allocation2], %s893
        %v895 = vld [vmem:[%s894] sm:$0xff]
        %v896 = vld [vmem:[%s894 + $0x8] sm:$0xff]
        %v897 = vld [vmem:[%s894 + $0x10] sm:$0xff]
        %v898 = vld [vmem:[%s894 + $0x18] sm:$0xff]
        %v899 = vld [vmem:[#allocation3] sm:$0xff]
        %v900 = vld [vmem:[#allocation3 + $0x8] sm:$0xff]
        %v901 = vld [vmem:[#allocation3 + $0x10] sm:$0xff]
        %v902 = vld [vmem:[#allocation3 + $0x18] sm:$0xff]
        %v903 = vld [vmem:[#allocation3 + $0x20] sm:$0xff]
        %v904 = vld [vmem:[#allocation3 + $0x28] sm:$0xff]
        %v905 = vld [vmem:[#allocation3 + $0x30] sm:$0xff]
        %v906 = vld [vmem:[#allocation3 + $0x38] sm:$0xff]
        %v907 = vld [vmem:[#allocation3 + $0x40] sm:$0xff]
        %v908 = vld [vmem:[#allocation3 + $0x48] sm:$0xff]
        %v909 = vld [vmem:[#allocation3 + $0x50] sm:$0xff]
        %v910 = vld [vmem:[#allocation3 + $0x58] sm:$0xff]
        %v911 = vld [vmem:[#allocation3 + $0x60] sm:$0xff]
        %v912 = vld [vmem:[#allocation3 + $0x68] sm:$0xff]
        %v913 = vld [vmem:[#allocation3 + $0x70] sm:$0xff]
        %v914 = vld [vmem:[#allocation3 + $0x78] sm:$0xff]
        %v915 = vld [vmem:[#allocation3 + $0x80] sm:$0xff]
        %v916 = vld [vmem:[#allocation3 + $0x88] sm:$0xff]
        %v917 = vld [vmem:[#allocation3 + $0x90] sm:$0xff]
        %v918 = vld [vmem:[#allocation3 + $0x98] sm:$0xff]
        %v919 = vld [vmem:[#allocation3 + $0xa0] sm:$0xff]
        %v920 = vld [vmem:[#allocation3 + $0xa8] sm:$0xff]
        %v921 = vld [vmem:[#allocation3 + $0xb0] sm:$0xff]
        %v922 = vld [vmem:[#allocation3 + $0xb8] sm:$0xff]
        %v923 = vld [vmem:[#allocation3 + $0xc0] sm:$0xff]
        %v924 = vld [vmem:[#allocation3 + $0xc8] sm:$0xff]
        %v925 = vld [vmem:[#allocation3 + $0xd0] sm:$0xff]
        %v926 = vld [vmem:[#allocation3 + $0xd8] sm:$0xff]
        %v927 = vld [vmem:[#allocation3 + $0xe0] sm:$0xff]
        %v928 = vld [vmem:[#allocation3 + $0xe8] sm:$0xff]
        %v929 = vld [vmem:[#allocation3 + $0xf0] sm:$0xff]
        %v930 = vld [vmem:[#allocation3 + $0xf8] sm:$0xff]
        %v931 = vld [vmem:[#allocation3 + $0x100] sm:$0xff]
        %v932 = vld [vmem:[#allocation3 + $0x108] sm:$0xff]
        %v933 = vld [vmem:[#allocation3 + $0x110] sm:$0xff]
        %v934 = vld [vmem:[#allocation3 + $0x118] sm:$0xff]
        %v935 = vld [vmem:[#allocation3 + $0x120] sm:$0xff]
        %v936 = vld [vmem:[#allocation3 + $0x128] sm:$0xff]
        %v937 = vld [vmem:[#allocation3 + $0x130] sm:$0xff]
        %v938 = vld [vmem:[#allocation3 + $0x138] sm:$0xff]
        %v939 = vld [vmem:[#allocation3 + $0x140] sm:$0xff]
        %v940 = vld [vmem:[#allocation3 + $0x148] sm:$0xff]
        %v941 = vld [vmem:[#allocation3 + $0x150] sm:$0xff]
        %v942 = vld [vmem:[#allocation3 + $0x158] sm:$0xff]
        %v943 = vld [vmem:[#allocation3 + $0x160] sm:$0xff]
        %v944 = vld [vmem:[#allocation3 + $0x168] sm:$0xff]
        %v945 = vld [vmem:[#allocation3 + $0x170] sm:$0xff]
        %v946 = vld [vmem:[#allocation3 + $0x178] sm:$0xff]
        %v947 = vld [vmem:[#allocation3 + $0x180] sm:$0xff]
        %v948 = vld [vmem:[#allocation3 + $0x188] sm:$0xff]
        %v949 = vld [vmem:[#allocation3 + $0x190] sm:$0xff]
        %v950 = vld [vmem:[#allocation3 + $0x198] sm:$0xff]
        %v951 = vld [vmem:[#allocation3 + $0x1a0] sm:$0xff]
        %v952 = vld [vmem:[#allocation3 + $0x1a8] sm:$0xff]
        %v953 = vld [vmem:[#allocation3 + $0x1b0] sm:$0xff]
        %v954 = vld [vmem:[#allocation3 + $0x1b8] sm:$0xff]
        %v955 = vld [vmem:[#allocation3 + $0x1c0] sm:$0xff]
        %v956 = vld [vmem:[#allocation3 + $0x1c8] sm:$0xff]
        %v957 = vld [vmem:[#allocation3 + $0x1d0] sm:$0xff]
        %v958 = vld [vmem:[#allocation3 + $0x1d8] sm:$0xff]
        %v959 = vld [vmem:[#allocation3 + $0x1e0] sm:$0xff]
        %v960 = vld [vmem:[#allocation3 + $0x1e8] sm:$0xff]
        %v961 = vld [vmem:[#allocation3 + $0x1f0] sm:$0xff]
        %v962 = vld [vmem:[#allocation3 + $0x1f8] sm:$0xff]
        %963 = vmatpush.msra.mxu0 %v959
        %964 = vmatpush.msra.mxu0 %v955
        %965 = vmatpush.msra.mxu0 %v951
        %966 = vmatpush.msra.mxu0 %v947
        %967 = vmatpush.msra.mxu0 %v943
        %968 = vmatpush.msra.mxu0 %v939
        %969 = vmatpush.msra.mxu0 %v935
        %970 = vmatpush.msra.mxu0 %v931
        %971 = vmatpush.msra.mxu0 %v927
        %972 = vmatpush.msra.mxu0 %v923
        %973 = vmatpush.msra.mxu0 %v919
        %974 = vmatpush.msra.mxu0 %v915
        %975 = vmatpush.msra.mxu0 %v911
        %976 = vmatpush.msra.mxu0 %v907
        %977 = vmatpush.msra.mxu0 %v903
        %978 = vmatpush.msra.mxu0 %v899
        %979 = vmatmul.f32.gmra.mxu0 %v890
        %v980 = vpop.f32.mrf.mxu0
        %v981 = vadd.f32 0.0, %v980
        %982 = vdwg.mxu0
        %983 = vmatpush.msra.mxu0 %v960
        %984 = vmatpush.msra.mxu0 %v956
        %985 = vmatpush.msra.mxu0 %v952
        %986 = vmatpush.msra.mxu0 %v948
        %987 = vmatpush.msra.mxu0 %v944
        %988 = vmatpush.msra.mxu0 %v940
        %989 = vmatpush.msra.mxu0 %v936
        %990 = vmatpush.msra.mxu0 %v932
        %991 = vmatpush.msra.mxu0 %v928
        %992 = vmatpush.msra.mxu0 %v924
        %993 = vmatpush.msra.mxu0 %v920
        %994 = vmatpush.msra.mxu0 %v916
        %995 = vmatpush.msra.mxu0 %v912
        %996 = vmatpush.msra.mxu0 %v908
        %997 = vmatpush.msra.mxu0 %v904
        %998 = vmatpush.msra.mxu0 %v900
        %999 = vmatmul.f32.gmra.mxu0 %v890
        %v1000 = vpop.f32.mrf.mxu0
        %v1001 = vadd.f32 0.0, %v1000
        %1002 = vdwg.mxu0
        %1003 = vmatpush.msra.mxu0 %v961
        %1004 = vmatpush.msra.mxu0 %v957
        %1005 = vmatpush.msra.mxu0 %v953
        %1006 = vmatpush.msra.mxu0 %v949
        %1007 = vmatpush.msra.mxu0 %v945
        %1008 = vmatpush.msra.mxu0 %v941
        %1009 = vmatpush.msra.mxu0 %v937
        %1010 = vmatpush.msra.mxu0 %v933
        %1011 = vmatpush.msra.mxu0 %v929
        %1012 = vmatpush.msra.mxu0 %v925
        %1013 = vmatpush.msra.mxu0 %v921
        %1014 = vmatpush.msra.mxu0 %v917
        %1015 = vmatpush.msra.mxu0 %v913
        %1016 = vmatpush.msra.mxu0 %v909
        %1017 = vmatpush.msra.mxu0 %v905
        %1018 = vmatpush.msra.mxu0 %v901
        %1019 = vmatmul.f32.gmra.mxu0 %v890
        %v1020 = vpop.f32.mrf.mxu0
        %v1021 = vadd.f32 0.0, %v1020
        %1022 = vdwg.mxu0
        %1023 = vmatpush.msra.mxu0 %v962
        %1024 = vmatpush.msra.mxu0 %v958
        %1025 = vmatpush.msra.mxu0 %v954
        %1026 = vmatpush.msra.mxu0 %v950
        %1027 = vmatpush.msra.mxu0 %v946
        %1028 = vmatpush.msra.mxu0 %v942
        %1029 = vmatpush.msra.mxu0 %v938
        %1030 = vmatpush.msra.mxu0 %v934
        %1031 = vmatpush.msra.mxu0 %v930
        %1032 = vmatpush.msra.mxu0 %v926
        %1033 = vmatpush.msra.mxu0 %v922
        %1034 = vmatpush.msra.mxu0 %v918
        %1035 = vmatpush.msra.mxu0 %v914
        %1036 = vmatpush.msra.mxu0 %v910
        %1037 = vmatpush.msra.mxu0 %v906
        %1038 = vmatpush.msra.mxu0 %v902
        %1039 = vmatmul.f32.gmra.mxu0 %v890
        %v1040 = vpop.f32.mrf.mxu0
        %v1041 = vadd.f32 0.0, %v1040
        %1042 = vdwg.mxu0
        %v1043 = vadd.f32 %v895, %v981
        %v1044 = vadd.f32 %v896, %v1001
        %v1045 = vadd.f32 %v897, %v1021
        %v1046 = vadd.f32 %v898, %v1041
        %v1047 = vxor.u32 %v1043, 2147483648
        %v1048 = vmul.f32 %v1047, 1.442695
        %v1049 = vpow.pop %v1048
        %v1050 = vadd.f32 %v1049, 1.0
        %v1051 = vrcp.pop %v1050
        %v1052 = vmul.f32 %v1050, %v1051
        %v1053 = vsub.f32 1.0, %v1052
        %v1054 = vmul.f32 %v1051, %v1053
        %v1055 = vadd.f32 %v1051, %v1054
        %vm1056 = vweird.f32 %v1050
        %vm1057 = vweird.f32 %v1051
        %vm1058 = vmor %vm1056, %vm1057
        %v1059 = vsel %vm1058, %v1051, %v1055
        %v1060 = vand.u32 2147483647, %v1050
        %vm1061 = vcmp.eq.f32.partialorder %v1060, 8.507059e+37
        %v1062 = vand.u32 %v1050, 2147483648
        %v1063 = vor.u32 1.1754944e-38, %v1062
        %v1064 = vsel %vm1061, %v1063, %v1059
        %v1065 = vmul.f32 1.0, %v1064
        %v1066 = vxor.u32 %v1044, 2147483648
        %v1067 = vmul.f32 %v1066, 1.442695
        %v1068 = vpow.pop %v1067
        %v1069 = vadd.f32 %v1068, 1.0
        %v1070 = vrcp.pop %v1069
        %v1071 = vmul.f32 %v1069, %v1070
        %v1072 = vsub.f32 1.0, %v1071
        %v1073 = vmul.f32 %v1070, %v1072
        %v1074 = vadd.f32 %v1070, %v1073
        %vm1075 = vweird.f32 %v1069
        %vm1076 = vweird.f32 %v1070
        %vm1077 = vmor %vm1075, %vm1076
        %v1078 = vsel %vm1077, %v1070, %v1074
        %v1079 = vand.u32 2147483647, %v1069
        %vm1080 = vcmp.eq.f32.partialorder %v1079, 8.507059e+37
        %v1081 = vand.u32 %v1069, 2147483648
        %v1082 = vor.u32 1.1754944e-38, %v1081
        %v1083 = vsel %vm1080, %v1082, %v1078
        %v1084 = vmul.f32 1.0, %v1083
        %v1085 = vtanh.pop %v1045
        %v1086 = vxor.u32 %v1046, 2147483648
        %v1087 = vmul.f32 %v1086, 1.442695
        %v1088 = vpow.pop %v1087
        %v1089 = vadd.f32 %v1088, 1.0
        %v1090 = vrcp.pop %v1089
        %v1091 = vmul.f32 %v1089, %v1090
        %v1092 = vsub.f32 1.0, %v1091
        %v1093 = vmul.f32 %v1090, %v1092
        %v1094 = vadd.f32 %v1090, %v1093
        %vm1095 = vweird.f32 %v1089
        %vm1096 = vweird.f32 %v1090
        %vm1097 = vmor %vm1095, %vm1096
        %v1098 = vsel %vm1097, %v1090, %v1094
        %v1099 = vand.u32 2147483647, %v1089
        %vm1100 = vcmp.eq.f32.partialorder %v1099, 8.507059e+37
        %v1101 = vand.u32 %v1089, 2147483648
        %v1102 = vor.u32 1.1754944e-38, %v1101
        %v1103 = vsel %vm1100, %v1102, %v1098
        %v1104 = vmul.f32 1.0, %v1103
        %v1105 = vmul.f32 %v1084, %v888
        %v1106 = vmul.f32 %v1065, %v1085
        %v1107 = vadd.f32 %v1105, %v1106
        %v1108 = vtanh.pop %v1107
        %v1109 = vmul.f32 %v1104, %v1108
        %1110 = vst [vmem:[%s894] sm:$0xff] %v1109
        %s1111 = smul.u32 2, 4
        %s1112 = smul.addr %s1111, 8
        %s1113 = scalar_lea.vmem [#allocation2], %s1112
        %v1114 = vld [vmem:[%s1113] sm:$0xff]
        %v1115 = vld [vmem:[%s1113 + $0x8] sm:$0xff]
        %v1116 = vld [vmem:[%s1113 + $0x10] sm:$0xff]
        %v1117 = vld [vmem:[%s1113 + $0x18] sm:$0xff]
        %v1118 = vld [vmem:[#allocation3] sm:$0xff]
        %v1119 = vld [vmem:[#allocation3 + $0x8] sm:$0xff]
        %v1120 = vld [vmem:[#allocation3 + $0x10] sm:$0xff]
        %v1121 = vld [vmem:[#allocation3 + $0x18] sm:$0xff]
        %v1122 = vld [vmem:[#allocation3 + $0x20] sm:$0xff]
        %v1123 = vld [vmem:[#allocation3 + $0x28] sm:$0xff]
        %v1124 = vld [vmem:[#allocation3 + $0x30] sm:$0xff]
        %v1125 = vld [vmem:[#allocation3 + $0x38] sm:$0xff]
        %v1126 = vld [vmem:[#allocation3 + $0x40] sm:$0xff]
        %v1127 = vld [vmem:[#allocation3 + $0x48] sm:$0xff]
        %v1128 = vld [vmem:[#allocation3 + $0x50] sm:$0xff]
        %v1129 = vld [vmem:[#allocation3 + $0x58] sm:$0xff]
        %v1130 = vld [vmem:[#allocation3 + $0x60] sm:$0xff]
        %v1131 = vld [vmem:[#allocation3 + $0x68] sm:$0xff]
        %v1132 = vld [vmem:[#allocation3 + $0x70] sm:$0xff]
        %v1133 = vld [vmem:[#allocation3 + $0x78] sm:$0xff]
        %v1134 = vld [vmem:[#allocation3 + $0x80] sm:$0xff]
        %v1135 = vld [vmem:[#allocation3 + $0x88] sm:$0xff]
        %v1136 = vld [vmem:[#allocation3 + $0x90] sm:$0xff]
        %v1137 = vld [vmem:[#allocation3 + $0x98] sm:$0xff]
        %v1138 = vld [vmem:[#allocation3 + $0xa0] sm:$0xff]
        %v1139 = vld [vmem:[#allocation3 + $0xa8] sm:$0xff]
        %v1140 = vld [vmem:[#allocation3 + $0xb0] sm:$0xff]
        %v1141 = vld [vmem:[#allocation3 + $0xb8] sm:$0xff]
        %v1142 = vld [vmem:[#allocation3 + $0xc0] sm:$0xff]
        %v1143 = vld [vmem:[#allocation3 + $0xc8] sm:$0xff]
        %v1144 = vld [vmem:[#allocation3 + $0xd0] sm:$0xff]
        %v1145 = vld [vmem:[#allocation3 + $0xd8] sm:$0xff]
        %v1146 = vld [vmem:[#allocation3 + $0xe0] sm:$0xff]
        %v1147 = vld [vmem:[#allocation3 + $0xe8] sm:$0xff]
        %v1148 = vld [vmem:[#allocation3 + $0xf0] sm:$0xff]
        %v1149 = vld [vmem:[#allocation3 + $0xf8] sm:$0xff]
        %v1150 = vld [vmem:[#allocation3 + $0x100] sm:$0xff]
        %v1151 = vld [vmem:[#allocation3 + $0x108] sm:$0xff]
        %v1152 = vld [vmem:[#allocation3 + $0x110] sm:$0xff]
        %v1153 = vld [vmem:[#allocation3 + $0x118] sm:$0xff]
        %v1154 = vld [vmem:[#allocation3 + $0x120] sm:$0xff]
        %v1155 = vld [vmem:[#allocation3 + $0x128] sm:$0xff]
        %v1156 = vld [vmem:[#allocation3 + $0x130] sm:$0xff]
        %v1157 = vld [vmem:[#allocation3 + $0x138] sm:$0xff]
        %v1158 = vld [vmem:[#allocation3 + $0x140] sm:$0xff]
        %v1159 = vld [vmem:[#allocation3 + $0x148] sm:$0xff]
        %v1160 = vld [vmem:[#allocation3 + $0x150] sm:$0xff]
        %v1161 = vld [vmem:[#allocation3 + $0x158] sm:$0xff]
        %v1162 = vld [vmem:[#allocation3 + $0x160] sm:$0xff]
        %v1163 = vld [vmem:[#allocation3 + $0x168] sm:$0xff]
        %v1164 = vld [vmem:[#allocation3 + $0x170] sm:$0xff]
        %v1165 = vld [vmem:[#allocation3 + $0x178] sm:$0xff]
        %v1166 = vld [vmem:[#allocation3 + $0x180] sm:$0xff]
        %v1167 = vld [vmem:[#allocation3 + $0x188] sm:$0xff]
        %v1168 = vld [vmem:[#allocation3 + $0x190] sm:$0xff]
        %v1169 = vld [vmem:[#allocation3 + $0x198] sm:$0xff]
        %v1170 = vld [vmem:[#allocation3 + $0x1a0] sm:$0xff]
        %v1171 = vld [vmem:[#allocation3 + $0x1a8] sm:$0xff]
        %v1172 = vld [vmem:[#allocation3 + $0x1b0] sm:$0xff]
        %v1173 = vld [vmem:[#allocation3 + $0x1b8] sm:$0xff]
        %v1174 = vld [vmem:[#allocation3 + $0x1c0] sm:$0xff]
        %v1175 = vld [vmem:[#allocation3 + $0x1c8] sm:$0xff]
        %v1176 = vld [vmem:[#allocation3 + $0x1d0] sm:$0xff]
        %v1177 = vld [vmem:[#allocation3 + $0x1d8] sm:$0xff]
        %v1178 = vld [vmem:[#allocation3 + $0x1e0] sm:$0xff]
        %v1179 = vld [vmem:[#allocation3 + $0x1e8] sm:$0xff]
        %v1180 = vld [vmem:[#allocation3 + $0x1f0] sm:$0xff]
        %v1181 = vld [vmem:[#allocation3 + $0x1f8] sm:$0xff]
        %1182 = vmatpush.msra.mxu0 %v1178
        %1183 = vmatpush.msra.mxu0 %v1174
        %1184 = vmatpush.msra.mxu0 %v1170
        %1185 = vmatpush.msra.mxu0 %v1166
        %1186 = vmatpush.msra.mxu0 %v1162
        %1187 = vmatpush.msra.mxu0 %v1158
        %1188 = vmatpush.msra.mxu0 %v1154
        %1189 = vmatpush.msra.mxu0 %v1150
        %1190 = vmatpush.msra.mxu0 %v1146
        %1191 = vmatpush.msra.mxu0 %v1142
        %1192 = vmatpush.msra.mxu0 %v1138
        %1193 = vmatpush.msra.mxu0 %v1134
        %1194 = vmatpush.msra.mxu0 %v1130
        %1195 = vmatpush.msra.mxu0 %v1126
        %1196 = vmatpush.msra.mxu0 %v1122
        %1197 = vmatpush.msra.mxu0 %v1118
        %1198 = vmatmul.f32.gmra.mxu0 %v1109
        %v1199 = vpop.f32.mrf.mxu0
        %v1200 = vadd.f32 0.0, %v1199
        %1201 = vdwg.mxu0
        %1202 = vmatpush.msra.mxu0 %v1179
        %1203 = vmatpush.msra.mxu0 %v1175
        %1204 = vmatpush.msra.mxu0 %v1171
        %1205 = vmatpush.msra.mxu0 %v1167
        %1206 = vmatpush.msra.mxu0 %v1163
        %1207 = vmatpush.msra.mxu0 %v1159
        %1208 = vmatpush.msra.mxu0 %v1155
        %1209 = vmatpush.msra.mxu0 %v1151
        %1210 = vmatpush.msra.mxu0 %v1147
        %1211 = vmatpush.msra.mxu0 %v1143
        %1212 = vmatpush.msra.mxu0 %v1139
        %1213 = vmatpush.msra.mxu0 %v1135
        %1214 = vmatpush.msra.mxu0 %v1131
        %1215 = vmatpush.msra.mxu0 %v1127
        %1216 = vmatpush.msra.mxu0 %v1123
        %1217 = vmatpush.msra.mxu0 %v1119
        %1218 = vmatmul.f32.gmra.mxu0 %v1109
        %v1219 = vpop.f32.mrf.mxu0
        %v1220 = vadd.f32 0.0, %v1219
        %1221 = vdwg.mxu0
        %1222 = vmatpush.msra.mxu0 %v1180
        %1223 = vmatpush.msra.mxu0 %v1176
        %1224 = vmatpush.msra.mxu0 %v1172
        %1225 = vmatpush.msra.mxu0 %v1168
        %1226 = vmatpush.msra.mxu0 %v1164
        %1227 = vmatpush.msra.mxu0 %v1160
        %1228 = vmatpush.msra.mxu0 %v1156
        %1229 = vmatpush.msra.mxu0 %v1152
        %1230 = vmatpush.msra.mxu0 %v1148
        %1231 = vmatpush.msra.mxu0 %v1144
        %1232 = vmatpush.msra.mxu0 %v1140
        %1233 = vmatpush.msra.mxu0 %v1136
        %1234 = vmatpush.msra.mxu0 %v1132
        %1235 = vmatpush.msra.mxu0 %v1128
        %1236 = vmatpush.msra.mxu0 %v1124
        %1237 = vmatpush.msra.mxu0 %v1120
        %1238 = vmatmul.f32.gmra.mxu0 %v1109
        %v1239 = vpop.f32.mrf.mxu0
        %v1240 = vadd.f32 0.0, %v1239
        %1241 = vdwg.mxu0
        %1242 = vmatpush.msra.mxu0 %v1181
        %1243 = vmatpush.msra.mxu0 %v1177
        %1244 = vmatpush.msra.mxu0 %v1173
        %1245 = vmatpush.msra.mxu0 %v1169
        %1246 = vmatpush.msra.mxu0 %v1165
        %1247 = vmatpush.msra.mxu0 %v1161
        %1248 = vmatpush.msra.mxu0 %v1157
        %1249 = vmatpush.msra.mxu0 %v1153
        %1250 = vmatpush.msra.mxu0 %v1149
        %1251 = vmatpush.msra.mxu0 %v1145
        %1252 = vmatpush.msra.mxu0 %v1141
        %1253 = vmatpush.msra.mxu0 %v1137
        %1254 = vmatpush.msra.mxu0 %v1133
        %1255 = vmatpush.msra.mxu0 %v1129
        %1256 = vmatpush.msra.mxu0 %v1125
        %1257 = vmatpush.msra.mxu0 %v1121
        %1258 = vmatmul.f32.gmra.mxu0 %v1109
        %v1259 = vpop.f32.mrf.mxu0
        %v1260 = vadd.f32 0.0, %v1259
        %1261 = vdwg.mxu0
        %v1262 = vadd.f32 %v1114, %v1200
        %v1263 = vadd.f32 %v1115, %v1220
        %v1264 = vadd.f32 %v1116, %v1240
        %v1265 = vadd.f32 %v1117, %v1260
        %v1266 = vxor.u32 %v1262, 2147483648
        %v1267 = vmul.f32 %v1266, 1.442695
        %v1268 = vpow.pop %v1267
        %v1269 = vadd.f32 %v1268, 1.0
        %v1270 = vrcp.pop %v1269
        %v1271 = vmul.f32 %v1269, %v1270
        %v1272 = vsub.f32 1.0, %v1271
        %v1273 = vmul.f32 %v1270, %v1272
        %v1274 = vadd.f32 %v1270, %v1273
        %vm1275 = vweird.f32 %v1269
        %vm1276 = vweird.f32 %v1270
        %vm1277 = vmor %vm1275, %vm1276
        %v1278 = vsel %vm1277, %v1270, %v1274
        %v1279 = vand.u32 2147483647, %v1269
        %vm1280 = vcmp.eq.f32.partialorder %v1279, 8.507059e+37
        %v1281 = vand.u32 %v1269, 2147483648
        %v1282 = vor.u32 1.1754944e-38, %v1281
        %v1283 = vsel %vm1280, %v1282, %v1278
        %v1284 = vmul.f32 1.0, %v1283
        %v1285 = vxor.u32 %v1263, 2147483648
        %v1286 = vmul.f32 %v1285, 1.442695
        %v1287 = vpow.pop %v1286
        %v1288 = vadd.f32 %v1287, 1.0
        %v1289 = vrcp.pop %v1288
        %v1290 = vmul.f32 %v1288, %v1289
        %v1291 = vsub.f32 1.0, %v1290
        %v1292 = vmul.f32 %v1289, %v1291
        %v1293 = vadd.f32 %v1289, %v1292
        %vm1294 = vweird.f32 %v1288
        %vm1295 = vweird.f32 %v1289
        %vm1296 = vmor %vm1294, %vm1295
        %v1297 = vsel %vm1296, %v1289, %v1293
        %v1298 = vand.u32 2147483647, %v1288
        %vm1299 = vcmp.eq.f32.partialorder %v1298, 8.507059e+37
        %v1300 = vand.u32 %v1288, 2147483648
        %v1301 = vor.u32 1.1754944e-38, %v1300
        %v1302 = vsel %vm1299, %v1301, %v1297
        %v1303 = vmul.f32 1.0, %v1302
        %v1304 = vtanh.pop %v1264
        %v1305 = vxor.u32 %v1265, 2147483648
        %v1306 = vmul.f32 %v1305, 1.442695
        %v1307 = vpow.pop %v1306
        %v1308 = vadd.f32 %v1307, 1.0
        %v1309 = vrcp.pop %v1308
        %v1310 = vmul.f32 %v1308, %v1309
        %v1311 = vsub.f32 1.0, %v1310
        %v1312 = vmul.f32 %v1309, %v1311
        %v1313 = vadd.f32 %v1309, %v1312
        %vm1314 = vweird.f32 %v1308
        %vm1315 = vweird.f32 %v1309
        %vm1316 = vmor %vm1314, %vm1315
        %v1317 = vsel %vm1316, %v1309, %v1313
        %v1318 = vand.u32 2147483647, %v1308
        %vm1319 = vcmp.eq.f32.partialorder %v1318, 8.507059e+37
        %v1320 = vand.u32 %v1308, 2147483648
        %v1321 = vor.u32 1.1754944e-38, %v1320
        %v1322 = vsel %vm1319, %v1321, %v1317
        %v1323 = vmul.f32 1.0, %v1322
        %v1324 = vmul.f32 %v1303, %v1107
        %v1325 = vmul.f32 %v1284, %v1304
        %v1326 = vadd.f32 %v1324, %v1325
        %v1327 = vtanh.pop %v1326
        %v1328 = vmul.f32 %v1323, %v1327
        %1329 = vst [vmem:[%s1113] sm:$0xff] %v1328
        %s1330 = smul.u32 3, 4
        %s1331 = smul.addr %s1330, 8
        %s1332 = scalar_lea.vmem [#allocation2], %s1331
        %v1333 = vld [vmem:[%s1332] sm:$0xff]
        %v1334 = vld [vmem:[%s1332 + $0x8] sm:$0xff]
        %v1335 = vld [vmem:[%s1332 + $0x10] sm:$0xff]
        %v1336 = vld [vmem:[%s1332 + $0x18] sm:$0xff]
        %v1337 = vld [vmem:[#allocation3] sm:$0xff]
        %v1338 = vld [vmem:[#allocation3 + $0x8] sm:$0xff]
        %v1339 = vld [vmem:[#allocation3 + $0x10] sm:$0xff]
        %v1340 = vld [vmem:[#allocation3 + $0x18] sm:$0xff]
        %v1341 = vld [vmem:[#allocation3 + $0x20] sm:$0xff]
        %v1342 = vld [vmem:[#allocation3 + $0x28] sm:$0xff]
        %v1343 = vld [vmem:[#allocation3 + $0x30] sm:$0xff]
        %v1344 = vld [vmem:[#allocation3 + $0x38] sm:$0xff]
        %v1345 = vld [vmem:[#allocation3 + $0x40] sm:$0xff]
        %v1346 = vld [vmem:[#allocation3 + $0x48] sm:$0xff]
        %v1347 = vld [vmem:[#allocation3 + $0x50] sm:$0xff]
        %v1348 = vld [vmem:[#allocation3 + $0x58] sm:$0xff]
        %v1349 = vld [vmem:[#allocation3 + $0x60] sm:$0xff]
        %v1350 = vld [vmem:[#allocation3 + $0x68] sm:$0xff]
        %v1351 = vld [vmem:[#allocation3 + $0x70] sm:$0xff]
        %v1352 = vld [vmem:[#allocation3 + $0x78] sm:$0xff]
        %v1353 = vld [vmem:[#allocation3 + $0x80] sm:$0xff]
        %v1354 = vld [vmem:[#allocation3 + $0x88] sm:$0xff]
        %v1355 = vld [vmem:[#allocation3 + $0x90] sm:$0xff]
        %v1356 = vld [vmem:[#allocation3 + $0x98] sm:$0xff]
        %v1357 = vld [vmem:[#allocation3 + $0xa0] sm:$0xff]
        %v1358 = vld [vmem:[#allocation3 + $0xa8] sm:$0xff]
        %v1359 = vld [vmem:[#allocation3 + $0xb0] sm:$0xff]
        %v1360 = vld [vmem:[#allocation3 + $0xb8] sm:$0xff]
        %v1361 = vld [vmem:[#allocation3 + $0xc0] sm:$0xff]
        %v1362 = vld [vmem:[#allocation3 + $0xc8] sm:$0xff]
        %v1363 = vld [vmem:[#allocation3 + $0xd0] sm:$0xff]
        %v1364 = vld [vmem:[#allocation3 + $0xd8] sm:$0xff]
        %v1365 = vld [vmem:[#allocation3 + $0xe0] sm:$0xff]
        %v1366 = vld [vmem:[#allocation3 + $0xe8] sm:$0xff]
        %v1367 = vld [vmem:[#allocation3 + $0xf0] sm:$0xff]
        %v1368 = vld [vmem:[#allocation3 + $0xf8] sm:$0xff]
        %v1369 = vld [vmem:[#allocation3 + $0x100] sm:$0xff]
        %v1370 = vld [vmem:[#allocation3 + $0x108] sm:$0xff]
        %v1371 = vld [vmem:[#allocation3 + $0x110] sm:$0xff]
        %v1372 = vld [vmem:[#allocation3 + $0x118] sm:$0xff]
        %v1373 = vld [vmem:[#allocation3 + $0x120] sm:$0xff]
        %v1374 = vld [vmem:[#allocation3 + $0x128] sm:$0xff]
        %v1375 = vld [vmem:[#allocation3 + $0x130] sm:$0xff]
        %v1376 = vld [vmem:[#allocation3 + $0x138] sm:$0xff]
        %v1377 = vld [vmem:[#allocation3 + $0x140] sm:$0xff]
        %v1378 = vld [vmem:[#allocation3 + $0x148] sm:$0xff]
        %v1379 = vld [vmem:[#allocation3 + $0x150] sm:$0xff]
        %v1380 = vld [vmem:[#allocation3 + $0x158] sm:$0xff]
        %v1381 = vld [vmem:[#allocation3 + $0x160] sm:$0xff]
        %v1382 = vld [vmem:[#allocation3 + $0x168] sm:$0xff]
        %v1383 = vld [vmem:[#allocation3 + $0x170] sm:$0xff]
        %v1384 = vld [vmem:[#allocation3 + $0x178] sm:$0xff]
        %v1385 = vld [vmem:[#allocation3 + $0x180] sm:$0xff]
        %v1386 = vld [vmem:[#allocation3 + $0x188] sm:$0xff]
        %v1387 = vld [vmem:[#allocation3 + $0x190] sm:$0xff]
        %v1388 = vld [vmem:[#allocation3 + $0x198] sm:$0xff]
        %v1389 = vld [vmem:[#allocation3 + $0x1a0] sm:$0xff]
        %v1390 = vld [vmem:[#allocation3 + $0x1a8] sm:$0xff]
        %v1391 = vld [vmem:[#allocation3 + $0x1b0] sm:$0xff]
        %v1392 = vld [vmem:[#allocation3 + $0x1b8] sm:$0xff]
        %v1393 = vld [vmem:[#allocation3 + $0x1c0] sm:$0xff]
        %v1394 = vld [vmem:[#allocation3 + $0x1c8] sm:$0xff]
        %v1395 = vld [vmem:[#allocation3 + $0x1d0] sm:$0xff]
        %v1396 = vld [vmem:[#allocation3 + $0x1d8] sm:$0xff]
        %v1397 = vld [vmem:[#allocation3 + $0x1e0] sm:$0xff]
        %v1398 = vld [vmem:[#allocation3 + $0x1e8] sm:$0xff]
        %v1399 = vld [vmem:[#allocation3 + $0x1f0] sm:$0xff]
        %v1400 = vld [vmem:[#allocation3 + $0x1f8] sm:$0xff]
        %1401 = vmatpush.msra.mxu0 %v1397
        %1402 = vmatpush.msra.mxu0 %v1393
        %1403 = vmatpush.msra.mxu0 %v1389
        %1404 = vmatpush.msra.mxu0 %v1385
        %1405 = vmatpush.msra.mxu0 %v1381
        %1406 = vmatpush.msra.mxu0 %v1377
        %1407 = vmatpush.msra.mxu0 %v1373
        %1408 = vmatpush.msra.mxu0 %v1369
        %1409 = vmatpush.msra.mxu0 %v1365
        %1410 = vmatpush.msra.mxu0 %v1361
        %1411 = vmatpush.msra.mxu0 %v1357
        %1412 = vmatpush.msra.mxu0 %v1353
        %1413 = vmatpush.msra.mxu0 %v1349
        %1414 = vmatpush.msra.mxu0 %v1345
        %1415 = vmatpush.msra.mxu0 %v1341
        %1416 = vmatpush.msra.mxu0 %v1337
        %1417 = vmatmul.f32.gmra.mxu0 %v1328
        %v1418 = vpop.f32.mrf.mxu0
        %v1419 = vadd.f32 0.0, %v1418
        %1420 = vdwg.mxu0
        %1421 = vmatpush.msra.mxu0 %v1398
        %1422 = vmatpush.msra.mxu0 %v1394
        %1423 = vmatpush.msra.mxu0 %v1390
        %1424 = vmatpush.msra.mxu0 %v1386
        %1425 = vmatpush.msra.mxu0 %v1382
        %1426 = vmatpush.msra.mxu0 %v1378
        %1427 = vmatpush.msra.mxu0 %v1374
        %1428 = vmatpush.msra.mxu0 %v1370
        %1429 = vmatpush.msra.mxu0 %v1366
        %1430 = vmatpush.msra.mxu0 %v1362
        %1431 = vmatpush.msra.mxu0 %v1358
        %1432 = vmatpush.msra.mxu0 %v1354
        %1433 = vmatpush.msra.mxu0 %v1350
        %1434 = vmatpush.msra.mxu0 %v1346
        %1435 = vmatpush.msra.mxu0 %v1342
        %1436 = vmatpush.msra.mxu0 %v1338
        %1437 = vmatmul.f32.gmra.mxu0 %v1328
        %v1438 = vpop.f32.mrf.mxu0
        %v1439 = vadd.f32 0.0, %v1438
        %1440 = vdwg.mxu0
        %1441 = vmatpush.msra.mxu0 %v1399
        %1442 = vmatpush.msra.mxu0 %v1395
        %1443 = vmatpush.msra.mxu0 %v1391
        %1444 = vmatpush.msra.mxu0 %v1387
        %1445 = vmatpush.msra.mxu0 %v1383
        %1446 = vmatpush.msra.mxu0 %v1379
        %1447 = vmatpush.msra.mxu0 %v1375
        %1448 = vmatpush.msra.mxu0 %v1371
        %1449 = vmatpush.msra.mxu0 %v1367
        %1450 = vmatpush.msra.mxu0 %v1363
        %1451 = vmatpush.msra.mxu0 %v1359
        %1452 = vmatpush.msra.mxu0 %v1355
        %1453 = vmatpush.msra.mxu0 %v1351
        %1454 = vmatpush.msra.mxu0 %v1347
        %1455 = vmatpush.msra.mxu0 %v1343
        %1456 = vmatpush.msra.mxu0 %v1339
        %1457 = vmatmul.f32.gmra.mxu0 %v1328
        %v1458 = vpop.f32.mrf.mxu0
        %v1459 = vadd.f32 0.0, %v1458
        %1460 = vdwg.mxu0
        %1461 = vmatpush.msra.mxu0 %v1400
        %1462 = vmatpush.msra.mxu0 %v1396
        %1463 = vmatpush.msra.mxu0 %v1392
        %1464 = vmatpush.msra.mxu0 %v1388
        %1465 = vmatpush.msra.mxu0 %v1384
        %1466 = vmatpush.msra.mxu0 %v1380
        %1467 = vmatpush.msra.mxu0 %v1376
        %1468 = vmatpush.msra.mxu0 %v1372
        %1469 = vmatpush.msra.mxu0 %v1368
        %1470 = vmatpush.msra.mxu0 %v1364
        %1471 = vmatpush.msra.mxu0 %v1360
        %1472 = vmatpush.msra.mxu0 %v1356
        %1473 = vmatpush.msra.mxu0 %v1352
        %1474 = vmatpush.msra.mxu0 %v1348
        %1475 = vmatpush.msra.mxu0 %v1344
        %1476 = vmatpush.msra.mxu0 %v1340
        %1477 = vmatmul.f32.gmra.mxu0 %v1328
        %v1478 = vpop.f32.mrf.mxu0
        %v1479 = vadd.f32 0.0, %v1478
        %1480 = vdwg.mxu0
        %v1481 = vadd.f32 %v1333, %v1419
        %v1482 = vadd.f32 %v1334, %v1439
        %v1483 = vadd.f32 %v1335, %v1459
        %v1484 = vadd.f32 %v1336, %v1479
        %v1485 = vxor.u32 %v1481, 2147483648
        %v1486 = vmul.f32 %v1485, 1.442695
        %v1487 = vpow.pop %v1486
        %v1488 = vadd.f32 %v1487, 1.0
        %v1489 = vrcp.pop %v1488
        %v1490 = vmul.f32 %v1488, %v1489
        %v1491 = vsub.f32 1.0, %v1490
        %v1492 = vmul.f32 %v1489, %v1491
        %v1493 = vadd.f32 %v1489, %v1492
        %vm1494 = vweird.f32 %v1488
        %vm1495 = vweird.f32 %v1489
        %vm1496 = vmor %vm1494, %vm1495
        %v1497 = vsel %vm1496, %v1489, %v1493
        %v1498 = vand.u32 2147483647, %v1488
        %vm1499 = vcmp.eq.f32.partialorder %v1498, 8.507059e+37
        %v1500 = vand.u32 %v1488, 2147483648
        %v1501 = vor.u32 1.1754944e-38, %v1500
        %v1502 = vsel %vm1499, %v1501, %v1497
        %v1503 = vmul.f32 1.0, %v1502
        %v1504 = vxor.u32 %v1482, 2147483648
        %v1505 = vmul.f32 %v1504, 1.442695
        %v1506 = vpow.pop %v1505
        %v1507 = vadd.f32 %v1506, 1.0
        %v1508 = vrcp.pop %v1507
        %v1509 = vmul.f32 %v1507, %v1508
        %v1510 = vsub.f32 1.0, %v1509
        %v1511 = vmul.f32 %v1508, %v1510
        %v1512 = vadd.f32 %v1508, %v1511
        %vm1513 = vweird.f32 %v1507
        %vm1514 = vweird.f32 %v1508
        %vm1515 = vmor %vm1513, %vm1514
        %v1516 = vsel %vm1515, %v1508, %v1512
        %v1517 = vand.u32 2147483647, %v1507
        %vm1518 = vcmp.eq.f32.partialorder %v1517, 8.507059e+37
        %v1519 = vand.u32 %v1507, 2147483648
        %v1520 = vor.u32 1.1754944e-38, %v1519
        %v1521 = vsel %vm1518, %v1520, %v1516
        %v1522 = vmul.f32 1.0, %v1521
        %v1523 = vtanh.pop %v1483
        %v1524 = vxor.u32 %v1484, 2147483648
        %v1525 = vmul.f32 %v1524, 1.442695
        %v1526 = vpow.pop %v1525
        %v1527 = vadd.f32 %v1526, 1.0
        %v1528 = vrcp.pop %v1527
        %v1529 = vmul.f32 %v1527, %v1528
        %v1530 = vsub.f32 1.0, %v1529
        %v1531 = vmul.f32 %v1528, %v1530
        %v1532 = vadd.f32 %v1528, %v1531
        %vm1533 = vweird.f32 %v1527
        %vm1534 = vweird.f32 %v1528
        %vm1535 = vmor %vm1533, %vm1534
        %v1536 = vsel %vm1535, %v1528, %v1532
        %v1537 = vand.u32 2147483647, %v1527
        %vm1538 = vcmp.eq.f32.partialorder %v1537, 8.507059e+37
        %v1539 = vand.u32 %v1527, 2147483648
        %v1540 = vor.u32 1.1754944e-38, %v1539
        %v1541 = vsel %vm1538, %v1540, %v1536
        %v1542 = vmul.f32 1.0, %v1541
        %v1543 = vmul.f32 %v1522, %v1326
        %v1544 = vmul.f32 %v1503, %v1523
        %v1545 = vadd.f32 %v1543, %v1544
        %v1546 = vtanh.pop %v1545
        %v1547 = vmul.f32 %v1542, %v1546
        %1548 = vst [vmem:[%s1332] sm:$0xff] %v1547
        %1549 = vst [vmem:[%s483] sm:$0xff] %v1547
        %1550 = vst [vmem:[%s487] sm:$0xff] %v1545
        %v1551 = vld [vmem:[#allocation2] sm:$0xff]
        %v1552 = vld [vmem:[#allocation2 + $0x20] sm:$0xff]
        %v1553 = vld [vmem:[#allocation2 + $0x40] sm:$0xff]
        %v1554 = vld [vmem:[#allocation2 + $0x60] sm:$0xff]
        %v1555 = vld [vmem:[#allocation5] sm:$0xff]
        %v1556 = vld [vmem:[#allocation5 + $0x8] sm:$0xff]
        %v1557 = vld [vmem:[#allocation5 + $0x10] sm:$0xff]
        %v1558 = vld [vmem:[#allocation5 + $0x18] sm:$0xff]
        %v1559 = vld [vmem:[#allocation5 + $0x20] sm:$0xff]
        %v1560 = vld [vmem:[#allocation5 + $0x28] sm:$0xff]
        %v1561 = vld [vmem:[#allocation5 + $0x30] sm:$0xff]
        %v1562 = vld [vmem:[#allocation5 + $0x38] sm:$0xff]
        %v1563 = vld [vmem:[#allocation5 + $0x40] sm:$0xff]
        %v1564 = vld [vmem:[#allocation5 + $0x48] sm:$0xff]
        %v1565 = vld [vmem:[#allocation5 + $0x50] sm:$0xff]
        %v1566 = vld [vmem:[#allocation5 + $0x58] sm:$0xff]
        %v1567 = vld [vmem:[#allocation5 + $0x60] sm:$0xff]
        %v1568 = vld [vmem:[#allocation5 + $0x68] sm:$0xff]
        %v1569 = vld [vmem:[#allocation5 + $0x70] sm:$0xff]
        %v1570 = vld [vmem:[#allocation5 + $0x78] sm:$0xff]
        %v1571 = vld [vmem:[%s5] sm:$0x1]
        %v1573 = vperm.slane %v1571, 0
        %1575 = vmatpush.msra.mxu0 %v1570
        %1576 = vmatpush.msra.mxu0 %v1569
        %1577 = vmatpush.msra.mxu0 %v1568
        %1578 = vmatpush.msra.mxu0 %v1567
        %1579 = vmatpush.msra.mxu0 %v1566
        %1580 = vmatpush.msra.mxu0 %v1565
        %1581 = vmatpush.msra.mxu0 %v1564
        %1582 = vmatpush.msra.mxu0 %v1563
        %1583 = vmatpush.msra.mxu0 %v1562
        %1584 = vmatpush.msra.mxu0 %v1561
        %1585 = vmatpush.msra.mxu0 %v1560
        %1586 = vmatpush.msra.mxu0 %v1559
        %1587 = vmatpush.msra.mxu0 %v1558
        %1588 = vmatpush.msra.mxu0 %v1557
        %1589 = vmatpush.msra.mxu0 %v1556
        %1590 = vmatpush.msra.mxu0 %v1555
        %1591 = vmatmul.f32.gmra.mxu0 %v1551
        %v1592 = vpop.f32.mrf.mxu0
        %v1593 = vadd.f32 %v1573, %v1592
        %1594 = vmatmul.f32.gmra.mxu0 %v1552
        %v1595 = vpop.f32.mrf.mxu0
        %v1596 = vadd.f32 %v1573, %v1595
        %1597 = vmatmul.f32.gmra.mxu0 %v1553
        %v1598 = vpop.f32.mrf.mxu0
        %v1599 = vadd.f32 %v1573, %v1598
        %1600 = vmatmul.f32.gmra.mxu0 %v1554
        %v1601 = vpop.f32.mrf.mxu0
        %v1602 = vadd.f32 %v1573, %v1601
        %1603 = vdwg.mxu0
        %1604 = vst [vmem:[%s478] sm:$0xff] %v1593
        %1605 = vst [vmem:[%s478 + $0x8] sm:$0xff] %v1596
        %1606 = vst [vmem:[%s478 + $0x10] sm:$0xff] %v1599
        %1607 = vst [vmem:[%s478 + $0x18] sm:$0xff] %v1602
        %s1608 = smul.u32 4, %s29
        %p1609 = scmp.lt.s32.totalorder %s28, 0
        %s1610 = scalar_select %p1609, %s28, 0
        %p1611 = scmp.lt.s32.totalorder %s1608, 7
        %s1612 = scalar_select %p1611, %s1608, 7
        %s1613 = smul.addr %s1610, 8
        %s1614 = sadd.s32 %s1612, %s1613
        %s1615 = smul.addr %s1614, 8
        %s1616 = scalar_lea.vmem %s8, %s1615
        %p1617 = scmp.lt.s32.totalorder %s28, 0
        %s1618 = scalar_select %p1617, %s28, 0
        %s1619 = smul.addr %s1618, 8
        %s1620 = scalar_lea.vmem %s9, %s1619
        %p1621 = scmp.lt.s32.totalorder %s28, 0
        %s1622 = scalar_select %p1621, %s28, 0
        %s1623 = smul.addr %s1622, 8
        %s1624 = scalar_lea.vmem %s10, %s1623
        // Predicated region
        $region65: #{dkt_forward.1} parent=51 // pred_check
          %p1625 = pneg %p241
        $region66: #{dkt_forward.1} parent=51 // pred_check_branch
          %1627 = sbr.rel (%p1625) target = $region68
        $region67: #{dkt_forward.1} parent=51 // pred_region
          %s1628 = smul.u32 4, %s29
        $region68: #{dkt_forward.1} parent=51 // pred_fallthru
          _
        // Predicated region
        $region69: #{dkt_forward.1} parent=51 // pred_check
          %p1629 = pneg %p267
        $region70: #{dkt_forward.1} parent=51 // pred_check_branch
          %1631 = sbr.rel (%p1629) target = $region72
        $region71: #{dkt_forward.1} parent=51 // pred_region
          _
        $region72: #{dkt_forward.1} parent=51 // pred_fallthru
          _
        // Predicated region
        $region73: #{dkt_forward.1} parent=51 // pred_check
          %p1632 = pneg %p293
        $region74: #{dkt_forward.1} parent=51 // pred_check_branch
          %1634 = sbr.rel (%p1632) target = $region76
        $region75: #{dkt_forward.1} parent=51 // pred_region
          _
        $region76: #{dkt_forward.1} parent=51 // pred_fallthru
          _
        // Predicated region
        $region77: #{dkt_forward.1} parent=51 // pred_check
          %p1635 = pneg %p267
        $region78: #{dkt_forward.1} parent=51 // pred_check_branch
          %1637 = sbr.rel (%p1635) target = $region80
        $region79: #{dkt_forward.1} parent=51 // pred_region
          %p1638 = scmp.lt.s32.totalorder %s28, 0
          %s1639 = scalar_select %p1638, %s28, 0
          %s1640 = smul.addr %s1639, 8
          %s1641 = scalar_lea.vmem %s9, %s1640
        $region80: #{dkt_forward.1} parent=51 // pred_fallthru
          _
        // Predicated region
        $region81: #{dkt_forward.1} parent=51 // pred_check
          %p1642 = pneg %p293
        $region82: #{dkt_forward.1} parent=51 // pred_check_branch
          %1644 = sbr.rel (%p1642) target = $region84
        $region83: #{dkt_forward.1} parent=51 // pred_region
          %p1645 = scmp.lt.s32.totalorder %s28, 0
          %s1646 = scalar_select %p1645, %s28, 0
          %s1647 = smul.addr %s1646, 8
          %s1648 = scalar_lea.vmem %s10, %s1647
        $region84: #{dkt_forward.1} parent=51 // pred_fallthru
          _
      $region52: #{dkt_forward.1} parent=5 // pred_fallthru
        _
      %p1649 = scmp.le.s32.totalorder 2, %s19
      // Predicated region
      $region85: #{dkt_forward.1} parent=5 // pred_check
        %p1650 = pneg %p1649
      $region86: #{dkt_forward.1} parent=5 // pred_check_branch
        %1652 = sbr.rel (%p1650) target = $region88
      $region87: #{dkt_forward.1} parent=5 // pred_region
        %s1653 = ssub.s32 %s19, 2
        // Predicated region
        $region89: #{dkt_forward.1} parent=87 // pred_check
          %p1654 = pneg %p247
        $region90: #{dkt_forward.1} parent=87 // pred_check_branch
          %1656 = sbr.rel (%p1654) target = $region92
        $region91: #{dkt_forward.1} parent=87 // pred_region
          %s1657 = smul.u32 4, %s31
          %p1658 = scmp.lt.s32.totalorder %s30, 0
          %s1659 = scalar_select %p1658, %s30, 0
          %p1660 = scmp.lt.s32.totalorder %s1657, 7
          %s1661 = scalar_select %p1660, %s1657, 7
          %s1662 = smul.addr %s1659, 8
          %s1663 = sadd.s32 %s1661, %s1662
          %s1664 = smul.addr %s1663, 8
          %s1665 = scalar_lea.vmem %s8, %s1664
        $region92: #{dkt_forward.1} parent=87 // pred_fallthru
          _
      $region88: #{dkt_forward.1} parent=5 // pred_fallthru
        _
    $region6: #{dkt_forward.1} parent=1 // loop_footer
      %s23 = sadd.s32 1, %s19
    $region7: #{dkt_forward.1} parent=1 // loop_footer_branch
      %18 = sbr.rel target = $region3
    $region8: #{dkt_forward.1} parent=1 // loop_exit
      _
    %1666 = vsyncpa [#allocation4], 1
    %s1667 = scalar_lea.sflag [#allocation4], 1
    %1668 = vsyncpa %s1667, 1
    %1669 = vsyncpa [#allocation6], 1

</llo_original>
